<compile_context>
chip_gen: v6e
topology: v6e:2x2x1
jax: 0.10.0
libtpu: 0.0.40
codegen_flags: <defaults>
</compile_context>

<pallas_src>
import functools
import math

import jax
import jax.numpy as jnp
from jax import lax
from jax.experimental import pallas as pl
from jax.experimental.pallas import tpu as pltpu


def _lora_kernel(scaling, x_ref, w_ref, b_ref, a_ref, bm_ref, o_ref,
                 acc_ref, xa_ref):
    # x:  (tm, tk) bf16      w: (tn, tk) bf16 (native nn.Linear layout)
    # b:  (1, tn)  f32       a: (tk, r)  bf16     bm: (r, tn) bf16
    # o:  (tm, tn) out dtype
    # acc: (tm, tn) f32 scratch    xa: (tm, r) f32 scratch
    k = pl.program_id(2)

    @pl.when(k == 0)
    def _init():
        acc_ref[...] = jnp.zeros_like(acc_ref)
        xa_ref[...] = jnp.zeros_like(xa_ref)

    x = x_ref[...]
    # original: x (tm, tk) · W (tn, tk), contracting the shared K axis -> (tm, tn)
    acc_ref[...] += lax.dot_general(
        x, w_ref[...],
        dimension_numbers=(((1,), (1,)), ((), ())),
        preferred_element_type=jnp.float32)
    # LoRA left factor: fold x @ A into the same K loop -> (tm, r)
    xa_ref[...] += jnp.dot(x, a_ref[...], preferred_element_type=jnp.float32)

    @pl.when(k == pl.num_programs(2) - 1)
    def _epilogue():
        lora = jnp.dot(xa_ref[...].astype(bm_ref.dtype), bm_ref[...],
                       preferred_element_type=jnp.float32) * scaling
        o_ref[...] = (acc_ref[...] + b_ref[...] + lora).astype(o_ref.dtype)


def _pick_tile(dim, preferred, align):
    """Largest tile <= preferred that evenly divides dim; else fall back to the
    full dim (a full-extent block is always layout-legal)."""
    if dim <= preferred:
        return dim
    t = preferred
    while t >= align:
        if dim % t == 0:
            return t
        t //= 2
    return dim


def lora_forward(x, w, b, lora_a, lora_b, scaling,
                 tm_pref=256, tn_pref=256, tk_pref=256):
    """x: (M, K); w: (N, K) [PyTorch nn.Linear layout]; b: (N,);
    lora_a: (K, r); lora_b: (r, N). Returns (M, N) in x.dtype."""
    M, K = x.shape
    N, K2 = w.shape
    r = lora_a.shape[1]
    assert K2 == K and lora_a.shape == (K, r) and lora_b.shape == (r, N)

    out_dtype = x.dtype
    # bf16 operands halve HBM traffic on the binding resource (the weight) and
    # use the bf16 MXU path; accumulation / bias / epilogue stay in f32.
    xb = x.astype(jnp.bfloat16)
    wb = w.astype(jnp.bfloat16)          # native (N, K) layout — no transpose pass
    ab = lora_a.astype(jnp.bfloat16)
    bb = lora_b.astype(jnp.bfloat16)
    b2 = b.reshape(1, N).astype(jnp.float32)

    tm = _pick_tile(M, tm_pref, 8)
    tn = _pick_tile(N, tn_pref, 128)
    tk = _pick_tile(K, tk_pref, 128)
    grid = (M // tm, N // tn, K // tk)

    kernel = functools.partial(_lora_kernel, float(scaling))

    flops = 2 * M * N * K + 2 * M * K * r + 2 * M * r * N
    bytes_accessed = (xb.size * 2 + wb.size * 2 + ab.size * 2 + bb.size * 2
                      + b2.size * 4 + M * N * jnp.dtype(out_dtype).itemsize)

    return pl.pallas_call(
        kernel,
        out_shape=jax.ShapeDtypeStruct((M, N), out_dtype),
        grid_spec=pltpu.PrefetchScalarGridSpec(
            num_scalar_prefetch=0,
            grid=grid,
            in_specs=[
                pl.BlockSpec((tm, tk), lambda i, j, k: (i, k)),   # x
                pl.BlockSpec((tn, tk), lambda i, j, k: (j, k)),   # W (N, K)
                pl.BlockSpec((1, tn), lambda i, j, k: (0, j)),    # bias
                pl.BlockSpec((tk, r), lambda i, j, k: (k, 0)),    # lora_A
                pl.BlockSpec((r, tn), lambda i, j, k: (0, j)),    # lora_B
            ],
            out_specs=pl.BlockSpec((tm, tn), lambda i, j, k: (i, j)),
            scratch_shapes=[
                pltpu.VMEM((tm, tn), jnp.float32),   # main f32 accumulator
                pltpu.VMEM((tm, r), jnp.float32),    # x @ A f32 accumulator
            ],
        ),
        compiler_params=pltpu.CompilerParams(
            dimension_semantics=("parallel", "parallel", "arbitrary")),
        cost_estimate=pl.CostEstimate(
            flops=flops, transcendentals=0, bytes_accessed=bytes_accessed),
    )(xb, wb, b2, ab, bb)


def init_params(key, in_features, out_features, rank):
    """Deterministic init mirroring the module's __init__ (no checkpoint load)."""
    k_w, k_b, k_a = jax.random.split(key, 3)
    # nn.Linear default: kaiming_uniform_(a=sqrt(5)) -> U(-1/sqrt(fan_in), 1/sqrt(fan_in))
    bound_w = 1.0 / math.sqrt(in_features)
    w = jax.random.uniform(k_w, (out_features, in_features),
                           minval=-bound_w, maxval=bound_w, dtype=jnp.float32)
    b = jax.random.uniform(k_b, (out_features,),
                           minval=-bound_w, maxval=bound_w, dtype=jnp.float32)
    # lora_A: kaiming_uniform_(a=sqrt(5)) on (in_features, rank) -> fan_in = rank
    bound_a = 1.0 / math.sqrt(rank)
    lora_a = jax.random.uniform(k_a, (in_features, rank),
                                minval=-bound_a, maxval=bound_a, dtype=jnp.float32)
    # lora_B: zeros (as in the module)
    lora_b = jnp.zeros((rank, out_features), dtype=jnp.float32)
    return w, b, lora_a, lora_b


if __name__ == "__main__":
    in_features, out_features, rank, alpha = 512, 256, 4, 8
    scaling = alpha / rank
    batch = 128

    key = jax.random.PRNGKey(0)
    k_x, k_p, k_b2 = jax.random.split(key, 3)
    x = jax.random.normal(k_x, (batch, in_features), dtype=jnp.float32)
    w, b, lora_a, lora_b = init_params(k_p, in_features, out_features, rank)
    # The module inits lora_B to zeros (adapter starts as a no-op); use a
    # nonzero B here so the correctness check actually exercises the LoRA path.
    lora_b = 0.05 * jax.random.normal(k_b2, (rank, out_features), dtype=jnp.float32)

    out = lora_forward(x, w, b, lora_a, lora_b, scaling)
    out = jax.block_until_ready(out)
    assert out.shape == (batch, out_features)

    # Reference with the same bf16-in / f32-accumulate numerics as the kernel.
    xb, wb = x.astype(jnp.bfloat16), w.astype(jnp.bfloat16)
    ab, bb = lora_a.astype(jnp.bfloat16), lora_b.astype(jnp.bfloat16)
    orig = jnp.dot(xb, wb.T, preferred_element_type=jnp.float32) + b[None, :]
    xa = jnp.dot(xb, ab, preferred_element_type=jnp.float32)
    lora = jnp.dot(xa.astype(jnp.bfloat16), bb,
                   preferred_element_type=jnp.float32) * scaling
    ref = (orig + lora).astype(x.dtype)
    assert jnp.allclose(out, ref, atol=1e-2, rtol=1e-2), \
        float(jnp.max(jnp.abs(out - ref)))

    print("KERNEL_OK")
</pallas_src>

<mosaic_0001>
module attributes {stable_mosaic.version = 11 : i64} {
  func.func @_lora_kernel(%arg0: i32, %arg1: i32, %arg2: i32, %arg3: memref<128x256xbf16, #tpu.memory_space<vmem>>, %arg4: memref<256x256xbf16, #tpu.memory_space<vmem>>, %arg5: memref<1x256xf32, #tpu.memory_space<vmem>>, %arg6: memref<256x4xbf16, #tpu.memory_space<vmem>>, %arg7: memref<4x256xbf16, #tpu.memory_space<vmem>>, %arg8: memref<128x256xf32, #tpu.memory_space<vmem>>, %arg9: memref<128x256xf32, #tpu.memory_space<vmem>>, %arg10: memref<128x4xf32, #tpu.memory_space<vmem>>) attributes {dimension_semantics = [#tpu.dimension_semantics<parallel>, #tpu.dimension_semantics<parallel>, #tpu.dimension_semantics<arbitrary>], iteration_bounds = array<i64: 1, 1, 2>, scalar_prefetch = 0 : i64, scratch_operands = 2 : i64, tpu.core_type = #tpu.core_type<tc>, window_params = [{transform_indices = @transform_0, window_bounds = array<i64: 128, 256>}, {transform_indices = @transform_1, window_bounds = array<i64: 256, 256>}, {transform_indices = @transform_2, window_bounds = array<i64: 1, 256>}, {transform_indices = @transform_3, window_bounds = array<i64: 256, 4>}, {transform_indices = @transform_4, window_bounds = array<i64: 4, 256>}, {transform_indices = @transform_5, window_bounds = array<i64: 128, 256>}]} {
    %c0_i32 = arith.constant 0 : i32
    %0 = arith.cmpi eq, %arg2, %c0_i32 : i32
    %1 = arith.extui %0 : i1 to i32
    %c0_i32_0 = arith.constant 0 : i32
    %2 = arith.cmpi ne, %1, %c0_i32_0 : i32
    scf.if %2 {
      %cst_16 = arith.constant 0.000000e+00 : f32
      %17 = vector.broadcast %cst_16 : f32 to vector<128x256xf32>
      %c0_17 = arith.constant 0 : index
      %c0_18 = arith.constant 0 : index
      %18 = vector.load %arg9[%c0_17, %c0_18] : memref<128x256xf32, #tpu.memory_space<vmem>>, vector<128x256xf32>
      tpu.vector_store %arg9[%c0_17, %c0_18], %17 {strides = array<i32>} : memref<128x256xf32, #tpu.memory_space<vmem>>, vector<128x256xf32>,
      %cst_19 = arith.constant 0.000000e+00 : f32
      %19 = vector.broadcast %cst_19 : f32 to vector<128x4xf32>
      %c0_20 = arith.constant 0 : index
      %c0_21 = arith.constant 0 : index
      %20 = vector.load %arg10[%c0_20, %c0_21] : memref<128x4xf32, #tpu.memory_space<vmem>>, vector<128x4xf32>
      tpu.vector_store %arg10[%c0_20, %c0_21], %19 {strides = array<i32>} : memref<128x4xf32, #tpu.memory_space<vmem>>, vector<128x4xf32>,
    } else {
    }
    %c0 = arith.constant 0 : index
    %c0_1 = arith.constant 0 : index
    %3 = vector.load %arg3[%c0, %c0_1] : memref<128x256xbf16, #tpu.memory_space<vmem>>, vector<128x256xbf16>
    %c0_2 = arith.constant 0 : index
    %c0_3 = arith.constant 0 : index
    %4 = vector.load %arg9[%c0_2, %c0_3] : memref<128x256xf32, #tpu.memory_space<vmem>>, vector<128x256xf32>
    %c0_4 = arith.constant 0 : index
    %c0_5 = arith.constant 0 : index
    %5 = vector.load %arg4[%c0_4, %c0_5] : memref<256x256xbf16, #tpu.memory_space<vmem>>, vector<256x256xbf16>
    %cst = arith.constant dense<0.000000e+00> : vector<128x256xf32>
    %6 = tpu.matmul %3, %5, %cst {dimension_numbers = #tpu.dot_dimension_numbers<[1], [1], [0], [0], [0, 0, 1, 0], [], []>} : vector<128x256xbf16>, vector<256x256xbf16>, vector<128x256xf32> -> vector<128x256xf32>
    %7 = arith.addf %4, %6 : vector<128x256xf32>
    %c0_6 = arith.constant 0 : index
    %c0_7 = arith.constant 0 : index
    %8 = vector.load %arg9[%c0_6, %c0_7] : memref<128x256xf32, #tpu.memory_space<vmem>>, vector<128x256xf32>
    tpu.vector_store %arg9[%c0_6, %c0_7], %7 {strides = array<i32>} : memref<128x256xf32, #tpu.memory_space<vmem>>, vector<128x256xf32>,
    %c0_8 = arith.constant 0 : index
    %c0_9 = arith.constant 0 : index
    %9 = vector.load %arg10[%c0_8, %c0_9] : memref<128x4xf32, #tpu.memory_space<vmem>>, vector<128x4xf32>
    %c0_10 = arith.constant 0 : index
    %c0_11 = arith.constant 0 : index
    %10 = vector.load %arg6[%c0_10, %c0_11] : memref<256x4xbf16, #tpu.memory_space<vmem>>, vector<256x4xbf16>
    %cst_12 = arith.constant dense<0.000000e+00> : vector<128x4xf32>
    %11 = tpu.matmul %3, %10, %cst_12 {dimension_numbers = #tpu.dot_dimension_numbers<[1], [0], [0], [1], [0, 0, 1, 1], [], []>} : vector<128x256xbf16>, vector<256x4xbf16>, vector<128x4xf32> -> vector<128x4xf32>
    %12 = arith.addf %9, %11 : vector<128x4xf32>
    %c0_13 = arith.constant 0 : index
    %c0_14 = arith.constant 0 : index
    %13 = vector.load %arg10[%c0_13, %c0_14] : memref<128x4xf32, #tpu.memory_space<vmem>>, vector<128x4xf32>
    tpu.vector_store %arg10[%c0_13, %c0_14], %12 {strides = array<i32>} : memref<128x4xf32, #tpu.memory_space<vmem>>, vector<128x4xf32>,
    %c1_i32 = arith.constant 1 : i32
    %14 = arith.cmpi eq, %arg2, %c1_i32 : i32
    %15 = arith.extui %14 : i1 to i32
    %c0_i32_15 = arith.constant 0 : i32
    %16 = arith.cmpi ne, %15, %c0_i32_15 : i32
    scf.if %16 {
      %c0_16 = arith.constant 0 : index
      %c0_17 = arith.constant 0 : index
      %17 = vector.load %arg10[%c0_16, %c0_17] : memref<128x4xf32, #tpu.memory_space<vmem>>, vector<128x4xf32>
      %18 = arith.truncf %17 : vector<128x4xf32> to vector<128x4xbf16>
      %c0_18 = arith.constant 0 : index
      %c0_19 = arith.constant 0 : index
      %19 = vector.load %arg7[%c0_18, %c0_19] : memref<4x256xbf16, #tpu.memory_space<vmem>>, vector<4x256xbf16>
      %cst_20 = arith.constant dense<0.000000e+00> : vector<128x256xf32>
      %20 = tpu.matmul %18, %19, %cst_20 {dimension_numbers = #tpu.dot_dimension_numbers<[1], [0], [0], [1], [0, 0, 1, 1], [], []>} : vector<128x4xbf16>, vector<4x256xbf16>, vector<128x256xf32> -> vector<128x256xf32>
      %cst_21 = arith.constant 2.000000e+00 : f32
      %21 = vector.broadcast %cst_21 : f32 to vector<128x256xf32>
      %22 = arith.mulf %20, %21 : vector<128x256xf32>
      %c0_22 = arith.constant 0 : index
      %c0_23 = arith.constant 0 : index
      %23 = vector.load %arg9[%c0_22, %c0_23] : memref<128x256xf32, #tpu.memory_space<vmem>>, vector<128x256xf32>
      %c0_24 = arith.constant 0 : index
      %c0_25 = arith.constant 0 : index
      %24 = vector.load %arg5[%c0_24, %c0_25] : memref<1x256xf32, #tpu.memory_space<vmem>>, vector<1x256xf32>
      %25 = vector.broadcast %24 : vector<1x256xf32> to vector<128x256xf32>
      %26 = arith.addf %23, %25 : vector<128x256xf32>
      %27 = arith.addf %26, %22 : vector<128x256xf32>
      %c0_26 = arith.constant 0 : index
      %c0_27 = arith.constant 0 : index
      %28 = vector.load %arg8[%c0_26, %c0_27] : memref<128x256xf32, #tpu.memory_space<vmem>>, vector<128x256xf32>
      tpu.vector_store %arg8[%c0_26, %c0_27], %27 {strides = array<i32>} : memref<128x256xf32, #tpu.memory_space<vmem>>, vector<128x256xf32>,
    } else {
    }
    return
  }
  func.func @transform_0(%arg0: i32, %arg1: i32, %arg2: i32) -> (i32, i32) {
    %c0_i32 = arith.constant 0 : i32
    return %arg0, %arg2 : i32, i32
  }
  func.func @transform_1(%arg0: i32, %arg1: i32, %arg2: i32) -> (i32, i32) {
    %c0_i32 = arith.constant 0 : i32
    return %arg1, %arg2 : i32, i32
  }
  func.func @transform_2(%arg0: i32, %arg1: i32, %arg2: i32) -> (i32, i32) {
    %c0_i32 = arith.constant 0 : i32
    %c0_i32_0 = arith.constant 0 : i32
    return %c0_i32, %arg1 : i32, i32
  }
  func.func @transform_3(%arg0: i32, %arg1: i32, %arg2: i32) -> (i32, i32) {
    %c0_i32 = arith.constant 0 : i32
    %c0_i32_0 = arith.constant 0 : i32
    return %arg2, %c0_i32 : i32, i32
  }
  func.func @transform_4(%arg0: i32, %arg1: i32, %arg2: i32) -> (i32, i32) {
    %c0_i32 = arith.constant 0 : i32
    %c0_i32_0 = arith.constant 0 : i32
    return %c0_i32, %arg1 : i32, i32
  }
  func.func @transform_5(%arg0: i32, %arg1: i32, %arg2: i32) -> (i32, i32) {
    %c0_i32 = arith.constant 0 : i32
    return %arg0, %arg1 : i32, i32
  }
}

</mosaic_0001>

<llo_original>
// kernel: tpu_custom_call.1
$region0: #{tpu_custom_call.1}
  #allocation0 [shape = 'u32[]', space=smem, size = 0x4, offset = 0x4, fixed_abs, tag = 'smem constant byte address 0x4 - core index']
  #allocation1 [shape = 'u32[144,128]{1,0:T(1,128)}', space=vmem, size = 0x12000, scoped, tag = 'internal scratch']
  #allocation2 [shape = 'f32[128,256]{1,0:T(8,128)}', space=vmem, size = 0x20000, scoped, tag = 'scratch operand']
  #allocation3 [shape = 'f32[128,4]{1,0:T(8,128)}', space=vmem, size = 0x10000, scoped, tag = 'scratch operand']
  %s0 = inlined_call_operand.vmem [shape: bf16[128,512], index: 0, kind: input, shape index: {}]
  %s1 = inlined_call_operand.hbm [shape: bf16[256,512], index: 1, kind: input, shape index: {}]
  %s2 = inlined_call_operand.vmem [shape: f32[1,256], index: 2, kind: input, shape index: {}]
  %s3 = inlined_call_operand.vmem [shape: bf16[512,4], index: 3, kind: input, shape index: {}]
  %s4 = inlined_call_operand.vmem [shape: bf16[4,256], index: 4, kind: input, shape index: {}]
  %s5 = inlined_call_operand.hbm [shape: f32[128,256], index: 5, kind: output, shape index: {}]
  %s6 = sld [smem:[#allocation0]]
  $region103: #{tpu_custom_call.1} parent=0
    _
  %s8 = ssub.s32 1, %s6
  %s9 = scalar_select 0, %s8, %s6
  $region1: #{tpu_custom_call.1} parent=0
    #allocation4 [shape = 'u8[131072]{0}', space=vmem, size = 0x20000, scoped, tag = 'input window, operand 0']
    #allocation5 [shape = 'u8[262144]{0}', space=vmem, size = 0x40000, scoped, tag = 'input window, operand 1']
    #allocation6 [shape = 's32[2]{0}', space=sflag, size = 0x8, scoped, tag = 'scoped memory for tpu_custom_call.1']
    #allocation7 [shape = 's32[2]{0}', space=sflag, size = 0x8, scoped, tag = 'scoped memory for tpu_custom_call.1']
    #allocation8 [shape = 'u8[131072]{0}', space=vmem, size = 0x20000, scoped, tag = 'output window, operand 0, single buffered']
    %10 = vsyncpa [#allocation6], 0
    %s11 = scalar_lea.sflag [#allocation6], 1
    %12 = vsyncpa %s11, 0
    %13 = vsyncpa [#allocation7], 0
    loop: start=0, step=1, limit=4
    $region2: #{tpu_custom_call.1} parent=1 // loop_pre_header
      _
    $region3: #{tpu_custom_call.1} parent=1 // loop_header
      %s15 = sphi 0, %s19
      %p16 = scmp.ge.s32.totalorder %s15, 4
      %s22 = sphi 0, %s41
      %s23 = sphi 0, %s37
      %s24 = sphi 0, %s33
      %s25 = sphi 0, %s22
      %s26 = sphi 0, %s23
      %s27 = sphi 0, %s24
      %s28 = sphi 0, %s25
      %s29 = sphi 0, %s26
      %s30 = sphi 0, %s27
      %s46 = sphi 0, %s48
      %s49 = sphi 0, %s46
      %s50 = sphi 0, %s49
      %s66 = sphi 0, %s50
      %s74 = sphi 0, %s76
      %s77 = sphi 0, %s74
      %s78 = sphi 0, %s77
      %s94 = sphi 0, %s78
      %s100 = sphi 0, %s102
      %s103 = sphi 0, %s100
      %s104 = sphi 0, %s103
      %s120 = sphi 0, %s104
      %s126 = sphi 0, %s128
      %s129 = sphi 0, %s126
      %s130 = sphi 0, %s129
      %s146 = sphi 0, %s130
      %s152 = sphi 0, %s154
      %s155 = sphi 0, %s152
      %s156 = sphi 0, %s155
      %s172 = sphi 0, %s156
      %s180 = sphi 0, %s182
      %s183 = sphi 0, %s180
      %s184 = sphi 0, %s183
      %s200 = sphi 0, %s184
    $region4: #{tpu_custom_call.1} parent=1 // loop_header_branch
      %18 = sbr.rel (%p16) target = $region8
    $region5: #{tpu_custom_call.1} parent=1 // loop_body
      %s20 = ssub.s32 %s15, 1
      %s21 = ssub.s32 %s15, 2
      %s31 = sadd.s32 1, %s24
      %p32 = scmp.ge.s32.totalorder %s31, 2
      %s33 = scalar_select %p32, 0, %s31
      %s34 = sadd.s32 1, %s23
      %s35 = scalar_select %p32, %s34, %s23
      %p36 = scmp.ge.s32.totalorder %s35, 1
      %s37 = scalar_select %p36, 0, %s35
      %s38 = sadd.s32 1, %s22
      %s39 = scalar_select %p36, %s38, %s22
      %p40 = scmp.ge.s32.totalorder %s39, 1
      %s41 = scalar_select %p40, 0, %s39
      %s42 = ssub.s32 %s22, %s41
      %s43 = ssub.s32 %s24, %s33
      %s44 = sor.u32 %s42, %s43
      %p45 = scmp.eq.s32.totalorder %s44, 0
      %s47 = sadd.s32 %s46, 1
      %s48 = scalar_select %p45, %s46, %s47
      %p51 = pneg %p45
      %p52 = scmp.eq.s32.totalorder %s15, 1
      %p53 = por %p51, %p52
      %p54 = scmp.ne.s32.totalorder %s46, %s49
      %p55 = scmp.eq.s32.totalorder %s15, 0
      %p56 = por %p54, %p55
      %p57 = scmp.ne.s32.totalorder %s46, %s49
      %p58 = scmp.eq.s32.totalorder %s20, 1
      %p59 = por %p57, %p58
      %p60 = scmp.ne.s32.totalorder %s49, %s50
      %p61 = scmp.eq.s32.totalorder %s20, 0
      %p62 = por %p60, %p61
      %p63 = scmp.ne.s32.totalorder %s49, %s50
      %p64 = scmp.eq.s32.totalorder %s21, 1
      %p65 = por %p63, %p64
      %p67 = scmp.ne.s32.totalorder %s50, %s66
      %p68 = scmp.eq.s32.totalorder %s21, 0
      %p69 = por %p67, %p68
      %s70 = ssub.s32 %s23, %s37
      %s71 = ssub.s32 %s24, %s33
      %s72 = sor.u32 %s70, %s71
      %p73 = scmp.eq.s32.totalorder %s72, 0
      %s75 = sadd.s32 %s74, 1
      %s76 = scalar_select %p73, %s74, %s75
      %p79 = pneg %p73
      %p80 = scmp.eq.s32.totalorder %s15, 1
      %p81 = por %p79, %p80
      %p82 = scmp.ne.s32.totalorder %s74, %s77
      %p83 = scmp.eq.s32.totalorder %s15, 0
      %p84 = por %p82, %p83
      %p85 = scmp.ne.s32.totalorder %s74, %s77
      %p86 = scmp.eq.s32.totalorder %s20, 1
      %p87 = por %p85, %p86
      %p88 = scmp.ne.s32.totalorder %s77, %s78
      %p89 = scmp.eq.s32.totalorder %s20, 0
      %p90 = por %p88, %p89
      %p91 = scmp.ne.s32.totalorder %s77, %s78
      %p92 = scmp.eq.s32.totalorder %s21, 1
      %p93 = por %p91, %p92
      %p95 = scmp.ne.s32.totalorder %s78, %s94
      %p96 = scmp.eq.s32.totalorder %s21, 0
      %p97 = por %p95, %p96
      %s98 = ssub.s32 %s23, %s37
      %p99 = scmp.eq.s32.totalorder %s98, 0
      %s101 = sadd.s32 %s100, 1
      %s102 = scalar_select %p99, %s100, %s101
      %p105 = pneg %p99
      %p106 = scmp.eq.s32.totalorder %s15, 1
      %p107 = por %p105, %p106
      %p108 = scmp.ne.s32.totalorder %s100, %s103
      %p109 = scmp.eq.s32.totalorder %s15, 0
      %p110 = por %p108, %p109
      %p111 = scmp.ne.s32.totalorder %s100, %s103
      %p112 = scmp.eq.s32.totalorder %s20, 1
      %p113 = por %p111, %p112
      %p114 = scmp.ne.s32.totalorder %s103, %s104
      %p115 = scmp.eq.s32.totalorder %s20, 0
      %p116 = por %p114, %p115
      %p117 = scmp.ne.s32.totalorder %s103, %s104
      %p118 = scmp.eq.s32.totalorder %s21, 1
      %p119 = por %p117, %p118
      %p121 = scmp.ne.s32.totalorder %s104, %s120
      %p122 = scmp.eq.s32.totalorder %s21, 0
      %p123 = por %p121, %p122
      %s124 = ssub.s32 %s24, %s33
      %p125 = scmp.eq.s32.totalorder %s124, 0
      %s127 = sadd.s32 %s126, 1
      %s128 = scalar_select %p125, %s126, %s127
      %p131 = pneg %p125
      %p132 = scmp.eq.s32.totalorder %s15, 1
      %p133 = por %p131, %p132
      %p134 = scmp.ne.s32.totalorder %s126, %s129
      %p135 = scmp.eq.s32.totalorder %s15, 0
      %p136 = por %p134, %p135
      %p137 = scmp.ne.s32.totalorder %s126, %s129
      %p138 = scmp.eq.s32.totalorder %s20, 1
      %p139 = por %p137, %p138
      %p140 = scmp.ne.s32.totalorder %s129, %s130
      %p141 = scmp.eq.s32.totalorder %s20, 0
      %p142 = por %p140, %p141
      %p143 = scmp.ne.s32.totalorder %s129, %s130
      %p144 = scmp.eq.s32.totalorder %s21, 1
      %p145 = por %p143, %p144
      %p147 = scmp.ne.s32.totalorder %s130, %s146
      %p148 = scmp.eq.s32.totalorder %s21, 0
      %p149 = por %p147, %p148
      %s150 = ssub.s32 %s23, %s37
      %p151 = scmp.eq.s32.totalorder %s150, 0
      %s153 = sadd.s32 %s152, 1
      %s154 = scalar_select %p151, %s152, %s153
      %p157 = pneg %p151
      %p158 = scmp.eq.s32.totalorder %s15, 1
      %p159 = por %p157, %p158
      %p160 = scmp.ne.s32.totalorder %s152, %s155
      %p161 = scmp.eq.s32.totalorder %s15, 0
      %p162 = por %p160, %p161
      %p163 = scmp.ne.s32.totalorder %s152, %s155
      %p164 = scmp.eq.s32.totalorder %s20, 1
      %p165 = por %p163, %p164
      %p166 = scmp.ne.s32.totalorder %s155, %s156
      %p167 = scmp.eq.s32.totalorder %s20, 0
      %p168 = por %p166, %p167
      %p169 = scmp.ne.s32.totalorder %s155, %s156
      %p170 = scmp.eq.s32.totalorder %s21, 1
      %p171 = por %p169, %p170
      %p173 = scmp.ne.s32.totalorder %s156, %s172
      %p174 = scmp.eq.s32.totalorder %s21, 0
      %p175 = por %p173, %p174
      %s176 = ssub.s32 %s22, %s41
      %s177 = ssub.s32 %s23, %s37
      %s178 = sor.u32 %s176, %s177
      %p179 = scmp.eq.s32.totalorder %s178, 0
      %s181 = sadd.s32 %s180, 1
      %s182 = scalar_select %p179, %s180, %s181
      %p185 = pneg %p179
      %p186 = scmp.eq.s32.totalorder %s15, 1
      %p187 = por %p185, %p186
      %p188 = scmp.ne.s32.totalorder %s180, %s183
      %p189 = scmp.eq.s32.totalorder %s15, 0
      %p190 = por %p188, %p189
      %p191 = scmp.ne.s32.totalorder %s180, %s183
      %p192 = scmp.eq.s32.totalorder %s20, 1
      %p193 = por %p191, %p192
      %p194 = scmp.ne.s32.totalorder %s183, %s184
      %p195 = scmp.eq.s32.totalorder %s20, 0
      %p196 = por %p194, %p195
      %p197 = scmp.ne.s32.totalorder %s183, %s184
      %p198 = scmp.eq.s32.totalorder %s21, 1
      %p199 = por %p197, %p198
      %p201 = scmp.ne.s32.totalorder %s184, %s200
      %p202 = scmp.eq.s32.totalorder %s21, 0
      %p203 = por %p201, %p202
      %p204 = scmp.le.s32.totalorder 1, %s15
      %p205 = scmp.lt.s32.totalorder %s15, 3
      %p206 = pnand %p204, %p205
      %p207 = pneg %p206
      // Predicated region
      $region9: #{tpu_custom_call.1} parent=5 // pred_check
        _
      $region10: #{tpu_custom_call.1} parent=5 // pred_check_branch
        %209 = sbr.rel (%p206) target = $region12
      $region11: #{tpu_custom_call.1} parent=5 // pred_region
        %s210 = ssub.s32 %s15, 1
        // Predicated region
        $region13: #{tpu_custom_call.1} parent=11 // pred_check
          %p211 = pneg %p116
        $region14: #{tpu_custom_call.1} parent=11 // pred_check_branch
          %213 = sbr.rel (%p211) target = $region16
        $region15: #{tpu_custom_call.1} parent=11 // pred_region
          %s214 = smul.u32 2, %s26
          %p215 = scmp.lt.s32.totalorder %s214, 1
          %s216 = scalar_select %p215, %s214, 1
          %s217 = scalar_lea.vmem %s2, %s216
          %s218 = smul.u32 2, %s26
        $region16: #{tpu_custom_call.1} parent=11 // pred_fallthru
          _
        // Predicated region
        $region17: #{tpu_custom_call.1} parent=11 // pred_check
          %p219 = pneg %p168
        $region18: #{tpu_custom_call.1} parent=11 // pred_check_branch
          %221 = sbr.rel (%p219) target = $region20
        $region19: #{tpu_custom_call.1} parent=11 // pred_region
          %s222 = smul.u32 2, %s26
          %p223 = scmp.lt.s32.totalorder %s222, 1
          %s224 = scalar_select %p223, %s222, 1
          %s225 = smul.addr %s224, 2
          %s226 = scalar_lea.vmem %s4, %s225
          %s227 = smul.u32 2, %s26
        $region20: #{tpu_custom_call.1} parent=11 // pred_fallthru
          _
      $region12: #{tpu_custom_call.1} parent=5 // pred_fallthru
        _
      %p228 = scmp.lt.s32.totalorder %s15, 2
      // Predicated region
      $region21: #{tpu_custom_call.1} parent=5 // pred_check
        %p229 = pneg %p228
      $region22: #{tpu_custom_call.1} parent=5 // pred_check_branch
        %231 = sbr.rel (%p229) target = $region24
      $region23: #{tpu_custom_call.1} parent=5 // pred_region
        // Predicated region
        $region25: #{tpu_custom_call.1} parent=23 // pred_check
          %p232 = pneg %p56
        $region26: #{tpu_custom_call.1} parent=23 // pred_check_branch
          %234 = sbr.rel (%p232) target = $region28
        $region27: #{tpu_custom_call.1} parent=23 // pred_region
          %s235 = sand.u32 %s46, 1
          %s236 = sand.u32 %s46, 1
          %s237 = smul.addr %s236, 128
          %s238 = scalar_lea.vmem [#allocation4], %s237
          %s239 = smul.u32 16, %s22
          %s240 = smul.u32 2, %s24
          %s241 = smul.addr %s239, 4
          %s242 = sadd.s32 %s240, %s241
          %s243 = smul.addr %s242, 4
          %s244 = scalar_lea.vmem %s0, %s243
          // Predicated region
          $region29: #{tpu_custom_call.1} parent=27 // pred_check
            _
          $region30: #{tpu_custom_call.1} parent=27 // pred_check_branch
            %246 = sbr.rel (0) target = $region32
          $region31: #{tpu_custom_call.1} parent=27 // pred_region
            // Predicated region
            $region33: #{tpu_custom_call.1} parent=31 // pred_check
              _
            $region34: #{tpu_custom_call.1} parent=31 // pred_check_branch
              %248 = sbr.rel (0) target = $region36
            $region35: #{tpu_custom_call.1} parent=31 // pred_region
              // Predicated region
              $region48: #{tpu_custom_call.1} parent=35 // pred_check
                _
              $region49: #{tpu_custom_call.1} parent=35 // pred_check_branch
                %294 = sbr.rel (0) target = $region51
              $region50: #{tpu_custom_call.1} parent=35 // pred_region
                loop: start=0, step=1, limit=1
                $region52: #{tpu_custom_call.1} parent=50 // loop_pre_header
                  _
                $region53: #{tpu_custom_call.1} parent=50 // loop_header
                  %s296 = sphi 0, %s300
                  %p297 = scmp.ge.s32.totalorder %s296, 1
                  %s301 = sphi %s244, %s244
                  %s302 = sphi %s238, %s238
                $region54: #{tpu_custom_call.1} parent=50 // loop_header_branch
                  %299 = sbr.rel (%p297) target = $region58
                $region55: #{tpu_custom_call.1} parent=50 // loop_body
                  %v303 = vld [vmem:[%s301] sm:$0xff]
                  %304 = vst [vmem:[%s302] sm:$0xff] %v303
                  %v305 = vld [vmem:[%s301 + $0x10] sm:$0xff]
                  %306 = vst [vmem:[%s302 + $0x8] sm:$0xff] %v305
                  %v307 = vld [vmem:[%s301 + $0x20] sm:$0xff]
                  %308 = vst [vmem:[%s302 + $0x10] sm:$0xff] %v307
                  %v309 = vld [vmem:[%s301 + $0x30] sm:$0xff]
                  %310 = vst [vmem:[%s302 + $0x18] sm:$0xff] %v309
                  %v311 = vld [vmem:[%s301 + $0x40] sm:$0xff]
                  %312 = vst [vmem:[%s302 + $0x20] sm:$0xff] %v311
                  %v313 = vld [vmem:[%s301 + $0x50] sm:$0xff]
                  %314 = vst [vmem:[%s302 + $0x28] sm:$0xff] %v313
                  %v315 = vld [vmem:[%s301 + $0x60] sm:$0xff]
                  %316 = vst [vmem:[%s302 + $0x30] sm:$0xff] %v315
                  %v317 = vld [vmem:[%s301 + $0x70] sm:$0xff]
                  %318 = vst [vmem:[%s302 + $0x38] sm:$0xff] %v317
                  %v319 = vld [vmem:[%s301 + $0x80] sm:$0xff]
                  %320 = vst [vmem:[%s302 + $0x40] sm:$0xff] %v319
                  %v321 = vld [vmem:[%s301 + $0x90] sm:$0xff]
                  %322 = vst [vmem:[%s302 + $0x48] sm:$0xff] %v321
                  %v323 = vld [vmem:[%s301 + $0xa0] sm:$0xff]
                  %324 = vst [vmem:[%s302 + $0x50] sm:$0xff] %v323
                  %v325 = vld [vmem:[%s301 + $0xb0] sm:$0xff]
                  %326 = vst [vmem:[%s302 + $0x58] sm:$0xff] %v325
                  %v327 = vld [vmem:[%s301 + $0xc0] sm:$0xff]
                  %328 = vst [vmem:[%s302 + $0x60] sm:$0xff] %v327
                  %v329 = vld [vmem:[%s301 + $0xd0] sm:$0xff]
                  %330 = vst [vmem:[%s302 + $0x68] sm:$0xff] %v329
                  %v331 = vld [vmem:[%s301 + $0xe0] sm:$0xff]
                  %332 = vst [vmem:[%s302 + $0x70] sm:$0xff] %v331
                  %v333 = vld [vmem:[%s301 + $0xf0] sm:$0xff]
                  %334 = vst [vmem:[%s302 + $0x78] sm:$0xff] %v333
                $region56: #{tpu_custom_call.1} parent=50 // loop_footer
                  %s300 = sadd.s32 1, %s296
                $region57: #{tpu_custom_call.1} parent=50 // loop_footer_branch
                  %295 = sbr.rel target = $region53
                $region58: #{tpu_custom_call.1} parent=50 // loop_exit
                  _
              $region51: #{tpu_custom_call.1} parent=35 // pred_fallthru
                _
              // Predicated region
              $region59: #{tpu_custom_call.1} parent=35 // pred_check
                _
              $region60: #{tpu_custom_call.1} parent=35 // pred_check_branch
                %336 = sbr.rel target = $region62
              $region61: #{tpu_custom_call.1} parent=35 // pred_region
                _
              $region62: #{tpu_custom_call.1} parent=35 // pred_fallthru
                _
            $region36: #{tpu_custom_call.1} parent=31 // pred_fallthru
              _
            // Predicated region
            $region37: #{tpu_custom_call.1} parent=31 // pred_check
              _
            $region38: #{tpu_custom_call.1} parent=31 // pred_check_branch
              %250 = sbr.rel target = $region40
            $region39: #{tpu_custom_call.1} parent=31 // pred_region
              %s252 = ssub.s32 256, 1
              loop: start=0, step=1, limit=1
              $region41: #{tpu_custom_call.1} parent=39 // loop_pre_header
                _
              $region42: #{tpu_custom_call.1} parent=39 // loop_header
                %s254 = sphi 0, %s258
                %p255 = scmp.ge.s32.totalorder %s254, 1
                %s259 = sphi %s244, %s244
                %s260 = sphi %s238, %s238
              $region43: #{tpu_custom_call.1} parent=39 // loop_header_branch
                %257 = sbr.rel (%p255) target = $region47
              $region44: #{tpu_custom_call.1} parent=39 // loop_body
                %v261 = vld [vmem:[%s259] sm:%s252]
                %262 = vst [vmem:[%s260] sm:%s252] %v261
                %v263 = vld [vmem:[%s259 + $0x10] sm:%s252]
                %264 = vst [vmem:[%s260 + $0x8] sm:%s252] %v263
                %v265 = vld [vmem:[%s259 + $0x20] sm:%s252]
                %266 = vst [vmem:[%s260 + $0x10] sm:%s252] %v265
                %v267 = vld [vmem:[%s259 + $0x30] sm:%s252]
                %268 = vst [vmem:[%s260 + $0x18] sm:%s252] %v267
                %v269 = vld [vmem:[%s259 + $0x40] sm:%s252]
                %270 = vst [vmem:[%s260 + $0x20] sm:%s252] %v269
                %v271 = vld [vmem:[%s259 + $0x50] sm:%s252]
                %272 = vst [vmem:[%s260 + $0x28] sm:%s252] %v271
                %v273 = vld [vmem:[%s259 + $0x60] sm:%s252]
                %274 = vst [vmem:[%s260 + $0x30] sm:%s252] %v273
                %v275 = vld [vmem:[%s259 + $0x70] sm:%s252]
                %276 = vst [vmem:[%s260 + $0x38] sm:%s252] %v275
                %v277 = vld [vmem:[%s259 + $0x80] sm:%s252]
                %278 = vst [vmem:[%s260 + $0x40] sm:%s252] %v277
                %v279 = vld [vmem:[%s259 + $0x90] sm:%s252]
                %280 = vst [vmem:[%s260 + $0x48] sm:%s252] %v279
                %v281 = vld [vmem:[%s259 + $0xa0] sm:%s252]
                %282 = vst [vmem:[%s260 + $0x50] sm:%s252] %v281
                %v283 = vld [vmem:[%s259 + $0xb0] sm:%s252]
                %284 = vst [vmem:[%s260 + $0x58] sm:%s252] %v283
                %v285 = vld [vmem:[%s259 + $0xc0] sm:%s252]
                %286 = vst [vmem:[%s260 + $0x60] sm:%s252] %v285
                %v287 = vld [vmem:[%s259 + $0xd0] sm:%s252]
                %288 = vst [vmem:[%s260 + $0x68] sm:%s252] %v287
                %v289 = vld [vmem:[%s259 + $0xe0] sm:%s252]
                %290 = vst [vmem:[%s260 + $0x70] sm:%s252] %v289
                %v291 = vld [vmem:[%s259 + $0xf0] sm:%s252]
                %292 = vst [vmem:[%s260 + $0x78] sm:%s252] %v291
              $region45: #{tpu_custom_call.1} parent=39 // loop_footer
                %s258 = sadd.s32 1, %s254
              $region46: #{tpu_custom_call.1} parent=39 // loop_footer_branch
                %253 = sbr.rel target = $region42
              $region47: #{tpu_custom_call.1} parent=39 // loop_exit
                _
            $region40: #{tpu_custom_call.1} parent=31 // pred_fallthru
              _
          $region32: #{tpu_custom_call.1} parent=27 // pred_fallthru
            _
          %337 = vnop
        $region28: #{tpu_custom_call.1} parent=23 // pred_fallthru
          _
        // Predicated region
        $region63: #{tpu_custom_call.1} parent=23 // pred_check
          %p338 = pneg %p84
        $region64: #{tpu_custom_call.1} parent=23 // pred_check_branch
          %340 = sbr.rel (%p338) target = $region66
        $region65: #{tpu_custom_call.1} parent=23 // pred_region
          %s341 = sand.u32 %s74, 1
          %s342 = scalar_lea.sflag [#allocation6], %s341
          %s343 = sand.u32 %s74, 1
          %s344 = smul.addr %s343, 256
          %s345 = scalar_lea.vmem [#allocation5], %s344
          %s346 = smul.u32 32, %s23
          %s347 = smul.u32 2, %s24
          %s349 = ssub.s32 4096, 4096
          %350 = vsyncadd %s342, %s349
          %s351 = smul.addr %s346, 4
          %s352 = sadd.s32 %s347, %s351
          %s353 = smul.addr %s352, 64
          %s354 = scalar_lea.hbm %s1, %s353
          %s355 = sshll.u32 %s345, 4
          %s356 = int_to_ptr.vmem [resolvable:$true] %s355
          %361 = dma.hbm_to_vmem [thread:$0]  %s354, 4096, %s356, %s342, 256, 128, 8
        $region66: #{tpu_custom_call.1} parent=23 // pred_fallthru
          _
        // Predicated region
        $region67: #{tpu_custom_call.1} parent=23 // pred_check
          %p362 = pneg %p136
        $region68: #{tpu_custom_call.1} parent=23 // pred_check_branch
          %364 = sbr.rel (%p362) target = $region70
        $region69: #{tpu_custom_call.1} parent=23 // pred_region
          %s365 = smul.u32 32, %s24
          %p366 = scmp.lt.s32.totalorder %s365, 63
          %s367 = scalar_select %p366, %s365, 63
          %s368 = smul.addr %s367, 4
          %s369 = scalar_lea.vmem %s3, %s368
          %s370 = smul.u32 32, %s24
        $region70: #{tpu_custom_call.1} parent=23 // pred_fallthru
          _
      $region24: #{tpu_custom_call.1} parent=5 // pred_fallthru
        _
      %p371 = scmp.le.s32.totalorder 1, %s15
      %p372 = scmp.lt.s32.totalorder %s15, 3
      %p373 = pnand %p371, %p372
      %p374 = pneg %p373
      // Predicated region
      $region71: #{tpu_custom_call.1} parent=5 // pred_check
        _
      $region72: #{tpu_custom_call.1} parent=5 // pred_check_branch
        %376 = sbr.rel (%p373) target = $region74
      $region73: #{tpu_custom_call.1} parent=5 // pred_region
        %s377 = ssub.s32 %s15, 1
        %s378 = sand.u32 %s49, 1
        %s379 = sand.u32 %s49, 1
        %s380 = smul.addr %s379, 128
        %s381 = scalar_lea.vmem [#allocation4], %s380
        // Predicated region
        $region75: #{tpu_custom_call.1} parent=73 // pred_check
          %p382 = pneg %p62
        $region76: #{tpu_custom_call.1} parent=73 // pred_check_branch
          %384 = sbr.rel (%p382) target = $region78
        $region77: #{tpu_custom_call.1} parent=73 // pred_region
          _
        $region78: #{tpu_custom_call.1} parent=73 // pred_fallthru
          _
        %s385 = sand.u32 %s77, 1
        %s386 = scalar_lea.sflag [#allocation6], %s385
        %s387 = sand.u32 %s77, 1
        %s388 = smul.addr %s387, 256
        %s389 = scalar_lea.vmem [#allocation5], %s388
        // Predicated region
        $region79: #{tpu_custom_call.1} parent=73 // pred_check
          %p390 = pneg %p90
        $region80: #{tpu_custom_call.1} parent=73 // pred_check_branch
          %392 = sbr.rel (%p390) target = $region82
        $region81: #{tpu_custom_call.1} parent=73 // pred_region
          %393 = dma.done %s386, 4096
        $region82: #{tpu_custom_call.1} parent=73 // pred_fallthru
          _
        %s394 = sand.u32 %s49, 1
        %s395 = sand.u32 %s49, 1
        %s396 = smul.addr %s395, 128
        %s397 = scalar_lea.vmem [#allocation4], %s396
        %p398 = pneg %p62
        %p399 = pneg %p59
        %s400 = sand.u32 %s77, 1
        %s401 = scalar_lea.sflag [#allocation6], %s400
        %s402 = sand.u32 %s77, 1
        %s403 = smul.addr %s402, 256
        %s404 = scalar_lea.vmem [#allocation5], %s403
        %p405 = pneg %p90
        %p406 = pneg %p87
        %s407 = smul.u32 2, %s26
        %p408 = scmp.lt.s32.totalorder %s407, 1
        %s409 = scalar_select %p408, %s407, 1
        %s410 = scalar_lea.vmem %s2, %s409
        %p411 = pneg %p116
        %p412 = pneg %p113
        %s413 = smul.u32 32, %s27
        %p414 = scmp.lt.s32.totalorder %s413, 63
        %s415 = scalar_select %p414, %s413, 63
        %s416 = smul.addr %s415, 4
        %s417 = scalar_lea.vmem %s3, %s416
        %p418 = pneg %p142
        %p419 = pneg %p139
        %s420 = smul.u32 2, %s26
        %p421 = scmp.lt.s32.totalorder %s420, 1
        %s422 = scalar_select %p421, %s420, 1
        %s423 = smul.addr %s422, 2
        %s424 = scalar_lea.vmem %s4, %s423
        %p425 = pneg %p168
        %p426 = pneg %p165
        %p427 = pneg %p196
        %p428 = pneg %p193
        %s429 = smul.u32 16, %s25
        %s430 = smul.u32 2, %s27
        %s431 = smul.u32 32, %s26
        %s432 = smul.u32 2, %s27
        %s433 = smul.u32 2, %s26
        %p434 = scmp.lt.s32.totalorder %s433, 1
        %s435 = scalar_select %p434, %s433, 1
        %s436 = scalar_lea.vmem %s2, %s435
        %s437 = smul.u32 2, %s26
        %s438 = smul.u32 32, %s27
        %p439 = scmp.lt.s32.totalorder %s438, 63
        %s440 = scalar_select %p439, %s438, 63
        %s441 = smul.addr %s440, 4
        %s442 = scalar_lea.vmem %s3, %s441
        %s443 = smul.u32 32, %s27
        %s444 = smul.u32 2, %s26
        %p445 = scmp.lt.s32.totalorder %s444, 1
        %s446 = scalar_select %p445, %s444, 1
        %s447 = smul.addr %s446, 2
        %s448 = scalar_lea.vmem %s4, %s447
        %s449 = smul.u32 2, %s26
        %s450 = smul.u32 16, %s25
        %s451 = smul.u32 2, %s26
        %p453 = scmp.eq.s32.totalorder %s27, 0
        // Predicated region
        $region83: #{tpu_custom_call.1} parent=73 // pred_check
          %p454 = pneg %p453
        $region84: #{tpu_custom_call.1} parent=73 // pred_check_branch
          %456 = sbr.rel (%p454) target = $region86
        $region85: #{tpu_custom_call.1} parent=73 // pred_region
          %457 = vst [vmem:[#allocation2] sm:$0xff] 0.0
          %458 = vst [vmem:[#allocation2 + $0x8] sm:$0xff] 0.0
          %459 = vst [vmem:[#allocation2 + $0x10] sm:$0xff] 0.0
          %460 = vst [vmem:[#allocation2 + $0x18] sm:$0xff] 0.0
          %461 = vst [vmem:[#allocation2 + $0x20] sm:$0xff] 0.0
          %462 = vst [vmem:[#allocation2 + $0x28] sm:$0xff] 0.0
          %463 = vst [vmem:[#allocation2 + $0x30] sm:$0xff] 0.0
          %464 = vst [vmem:[#allocation2 + $0x38] sm:$0xff] 0.0
          %465 = vst [vmem:[#allocation2 + $0x40] sm:$0xff] 0.0
          %466 = vst [vmem:[#allocation2 + $0x48] sm:$0xff] 0.0
          %467 = vst [vmem:[#allocation2 + $0x50] sm:$0xff] 0.0
          %468 = vst [vmem:[#allocation2 + $0x58] sm:$0xff] 0.0
          %469 = vst [vmem:[#allocation2 + $0x60] sm:$0xff] 0.0
          %470 = vst [vmem:[#allocation2 + $0x68] sm:$0xff] 0.0
          %471 = vst [vmem:[#allocation2 + $0x70] sm:$0xff] 0.0
          %472 = vst [vmem:[#allocation2 + $0x78] sm:$0xff] 0.0
          %473 = vst [vmem:[#allocation2 + $0x80] sm:$0xff] 0.0
          %474 = vst [vmem:[#allocation2 + $0x88] sm:$0xff] 0.0
          %475 = vst [vmem:[#allocation2 + $0x90] sm:$0xff] 0.0
          %476 = vst [vmem:[#allocation2 + $0x98] sm:$0xff] 0.0
          %477 = vst [vmem:[#allocation2 + $0xa0] sm:$0xff] 0.0
          %478 = vst [vmem:[#allocation2 + $0xa8] sm:$0xff] 0.0
          %479 = vst [vmem:[#allocation2 + $0xb0] sm:$0xff] 0.0
          %480 = vst [vmem:[#allocation2 + $0xb8] sm:$0xff] 0.0
          %481 = vst [vmem:[#allocation2 + $0xc0] sm:$0xff] 0.0
          %482 = vst [vmem:[#allocation2 + $0xc8] sm:$0xff] 0.0
          %483 = vst [vmem:[#allocation2 + $0xd0] sm:$0xff] 0.0
          %484 = vst [vmem:[#allocation2 + $0xd8] sm:$0xff] 0.0
          %485 = vst [vmem:[#allocation2 + $0xe0] sm:$0xff] 0.0
          %486 = vst [vmem:[#allocation2 + $0xe8] sm:$0xff] 0.0
          %487 = vst [vmem:[#allocation2 + $0xf0] sm:$0xff] 0.0
          %488 = vst [vmem:[#allocation2 + $0xf8] sm:$0xff] 0.0
          %vm489 = vcmask 31744
          %490 = vst.msk [vmem:[#allocation3] sm:$0xff] %vm489, 0.0
          %491 = vst.msk [vmem:[#allocation3 + $0x8] sm:$0xff] %vm489, 0.0
          %492 = vst.msk [vmem:[#allocation3 + $0x10] sm:$0xff] %vm489, 0.0
          %493 = vst.msk [vmem:[#allocation3 + $0x18] sm:$0xff] %vm489, 0.0
          %494 = vst.msk [vmem:[#allocation3 + $0x20] sm:$0xff] %vm489, 0.0
          %495 = vst.msk [vmem:[#allocation3 + $0x28] sm:$0xff] %vm489, 0.0
          %496 = vst.msk [vmem:[#allocation3 + $0x30] sm:$0xff] %vm489, 0.0
          %497 = vst.msk [vmem:[#allocation3 + $0x38] sm:$0xff] %vm489, 0.0
          %498 = vst.msk [vmem:[#allocation3 + $0x40] sm:$0xff] %vm489, 0.0
          %499 = vst.msk [vmem:[#allocation3 + $0x48] sm:$0xff] %vm489, 0.0
          %500 = vst.msk [vmem:[#allocation3 + $0x50] sm:$0xff] %vm489, 0.0
          %501 = vst.msk [vmem:[#allocation3 + $0x58] sm:$0xff] %vm489, 0.0
          %502 = vst.msk [vmem:[#allocation3 + $0x60] sm:$0xff] %vm489, 0.0
          %503 = vst.msk [vmem:[#allocation3 + $0x68] sm:$0xff] %vm489, 0.0
          %504 = vst.msk [vmem:[#allocation3 + $0x70] sm:$0xff] %vm489, 0.0
          %505 = vst.msk [vmem:[#allocation3 + $0x78] sm:$0xff] %vm489, 0.0
        $region86: #{tpu_custom_call.1} parent=73 // pred_fallthru
          _
        %v506 = vld [vmem:[%s381] sm:$0xff]
        %v507 = vld [vmem:[%s381 + $0x8] sm:$0xff]
        %v508 = vld [vmem:[%s381 + $0x10] sm:$0xff]
        %v509 = vld [vmem:[%s381 + $0x18] sm:$0xff]
        %v510 = vld [vmem:[%s381 + $0x20] sm:$0xff]
        %v511 = vld [vmem:[%s381 + $0x28] sm:$0xff]
        %v512 = vld [vmem:[%s381 + $0x30] sm:$0xff]
        %v513 = vld [vmem:[%s381 + $0x38] sm:$0xff]
        %v514 = vld [vmem:[%s381 + $0x40] sm:$0xff]
        %v515 = vld [vmem:[%s381 + $0x48] sm:$0xff]
        %v516 = vld [vmem:[%s381 + $0x50] sm:$0xff]
        %v517 = vld [vmem:[%s381 + $0x58] sm:$0xff]
        %v518 = vld [vmem:[%s381 + $0x60] sm:$0xff]
        %v519 = vld [vmem:[%s381 + $0x68] sm:$0xff]
        %v520 = vld [vmem:[%s381 + $0x70] sm:$0xff]
        %v521 = vld [vmem:[%s381 + $0x78] sm:$0xff]
        %v522 = vld [vmem:[#allocation2] sm:$0xff]
        %v523 = vld [vmem:[#allocation2 + $0x8] sm:$0xff]
        %v524 = vld [vmem:[#allocation2 + $0x10] sm:$0xff]
        %v525 = vld [vmem:[#allocation2 + $0x18] sm:$0xff]
        %v526 = vld [vmem:[#allocation2 + $0x20] sm:$0xff]
        %v527 = vld [vmem:[#allocation2 + $0x28] sm:$0xff]
        %v528 = vld [vmem:[#allocation2 + $0x30] sm:$0xff]
        %v529 = vld [vmem:[#allocation2 + $0x38] sm:$0xff]
        %v530 = vld [vmem:[#allocation2 + $0x40] sm:$0xff]
        %v531 = vld [vmem:[#allocation2 + $0x48] sm:$0xff]
        %v532 = vld [vmem:[#allocation2 + $0x50] sm:$0xff]
        %v533 = vld [vmem:[#allocation2 + $0x58] sm:$0xff]
        %v534 = vld [vmem:[#allocation2 + $0x60] sm:$0xff]
        %v535 = vld [vmem:[#allocation2 + $0x68] sm:$0xff]
        %v536 = vld [vmem:[#allocation2 + $0x70] sm:$0xff]
        %v537 = vld [vmem:[#allocation2 + $0x78] sm:$0xff]
        %v538 = vld [vmem:[#allocation2 + $0x80] sm:$0xff]
        %v539 = vld [vmem:[#allocation2 + $0x88] sm:$0xff]
        %v540 = vld [vmem:[#allocation2 + $0x90] sm:$0xff]
        %v541 = vld [vmem:[#allocation2 + $0x98] sm:$0xff]
        %v542 = vld [vmem:[#allocation2 + $0xa0] sm:$0xff]
        %v543 = vld [vmem:[#allocation2 + $0xa8] sm:$0xff]
        %v544 = vld [vmem:[#allocation2 + $0xb0] sm:$0xff]
        %v545 = vld [vmem:[#allocation2 + $0xb8] sm:$0xff]
        %v546 = vld [vmem:[#allocation2 + $0xc0] sm:$0xff]
        %v547 = vld [vmem:[#allocation2 + $0xc8] sm:$0xff]
        %v548 = vld [vmem:[#allocation2 + $0xd0] sm:$0xff]
        %v549 = vld [vmem:[#allocation2 + $0xd8] sm:$0xff]
        %v550 = vld [vmem:[#allocation2 + $0xe0] sm:$0xff]
        %v551 = vld [vmem:[#allocation2 + $0xe8] sm:$0xff]
        %v552 = vld [vmem:[#allocation2 + $0xf0] sm:$0xff]
        %v553 = vld [vmem:[#allocation2 + $0xf8] sm:$0xff]
        %v554 = vld [vmem:[%s389] sm:$0xff]
        %v555 = vld [vmem:[%s389 + $0x8] sm:$0xff]
        %v556 = vld [vmem:[%s389 + $0x10] sm:$0xff]
        %v557 = vld [vmem:[%s389 + $0x18] sm:$0xff]
        %v558 = vld [vmem:[%s389 + $0x20] sm:$0xff]
        %v559 = vld [vmem:[%s389 + $0x28] sm:$0xff]
        %v560 = vld [vmem:[%s389 + $0x30] sm:$0xff]
        %v561 = vld [vmem:[%s389 + $0x38] sm:$0xff]
        %v562 = vld [vmem:[%s389 + $0x40] sm:$0xff]
        %v563 = vld [vmem:[%s389 + $0x48] sm:$0xff]
        %v564 = vld [vmem:[%s389 + $0x50] sm:$0xff]
        %v565 = vld [vmem:[%s389 + $0x58] sm:$0xff]
        %v566 = vld [vmem:[%s389 + $0x60] sm:$0xff]
        %v567 = vld [vmem:[%s389 + $0x68] sm:$0xff]
        %v568 = vld [vmem:[%s389 + $0x70] sm:$0xff]
        %v569 = vld [vmem:[%s389 + $0x78] sm:$0xff]
        %v570 = vld [vmem:[%s389 + $0x80] sm:$0xff]
        %v571 = vld [vmem:[%s389 + $0x88] sm:$0xff]
        %v572 = vld [vmem:[%s389 + $0x90] sm:$0xff]
        %v573 = vld [vmem:[%s389 + $0x98] sm:$0xff]
        %v574 = vld [vmem:[%s389 + $0xa0] sm:$0xff]
        %v575 = vld [vmem:[%s389 + $0xa8] sm:$0xff]
        %v576 = vld [vmem:[%s389 + $0xb0] sm:$0xff]
        %v577 = vld [vmem:[%s389 + $0xb8] sm:$0xff]
        %v578 = vld [vmem:[%s389 + $0xc0] sm:$0xff]
        %v579 = vld [vmem:[%s389 + $0xc8] sm:$0xff]
        %v580 = vld [vmem:[%s389 + $0xd0] sm:$0xff]
        %v581 = vld [vmem:[%s389 + $0xd8] sm:$0xff]
        %v582 = vld [vmem:[%s389 + $0xe0] sm:$0xff]
        %v583 = vld [vmem:[%s389 + $0xe8] sm:$0xff]
        %v584 = vld [vmem:[%s389 + $0xf0] sm:$0xff]
        %v585 = vld [vmem:[%s389 + $0xf8] sm:$0xff]
        %v602 = vunpack.c.l.b16 %v506
        %v603 = vunpack.c.h.b16 %v506
        %v604 = vunpack.c.l.b16 %v507
        %v605 = vunpack.c.h.b16 %v507
        %v606 = vunpack.c.l.b16 %v508
        %v607 = vunpack.c.h.b16 %v508
        %v608 = vunpack.c.l.b16 %v509
        %v609 = vunpack.c.h.b16 %v509
        %v610 = vunpack.c.l.b16 %v510
        %v611 = vunpack.c.h.b16 %v510
        %v612 = vunpack.c.l.b16 %v511
        %v613 = vunpack.c.h.b16 %v511
        %v614 = vunpack.c.l.b16 %v512
        %v615 = vunpack.c.h.b16 %v512
        %v616 = vunpack.c.l.b16 %v513
        %v617 = vunpack.c.h.b16 %v513
        %v618 = vunpack.c.l.b16 %v514
        %v619 = vunpack.c.h.b16 %v514
        %v620 = vunpack.c.l.b16 %v515
        %v621 = vunpack.c.h.b16 %v515
        %v622 = vunpack.c.l.b16 %v516
        %v623 = vunpack.c.h.b16 %v516
        %v624 = vunpack.c.l.b16 %v517
        %v625 = vunpack.c.h.b16 %v517
        %v626 = vunpack.c.l.b16 %v518
        %v627 = vunpack.c.h.b16 %v518
        %v628 = vunpack.c.l.b16 %v519
        %v629 = vunpack.c.h.b16 %v519
        %v630 = vunpack.c.l.b16 %v520
        %v631 = vunpack.c.h.b16 %v520
        %v632 = vunpack.c.l.b16 %v521
        %v633 = vunpack.c.h.b16 %v521
        %v634 = vpack.c.b16 %v604, %v602
        %v635 = vpack.c.b16 %v605, %v603
        %v636 = vpack.c.b16 %v608, %v606
        %v637 = vpack.c.b16 %v609, %v607
        %v638 = vpack.c.b16 %v612, %v610
        %v639 = vpack.c.b16 %v613, %v611
        %v640 = vpack.c.b16 %v616, %v614
        %v641 = vpack.c.b16 %v617, %v615
        %v642 = vpack.c.b16 %v620, %v618
        %v643 = vpack.c.b16 %v621, %v619
        %v644 = vpack.c.b16 %v624, %v622
        %v645 = vpack.c.b16 %v625, %v623
        %v646 = vpack.c.b16 %v628, %v626
        %v647 = vpack.c.b16 %v629, %v627
        %v648 = vpack.c.b16 %v632, %v630
        %v649 = vpack.c.b16 %v633, %v631
        %v698 = vunpack.c.l.b16 %v554
        %v699 = vunpack.c.h.b16 %v554
        %v700 = vunpack.c.l.b16 %v555
        %v701 = vunpack.c.h.b16 %v555
        %v702 = vunpack.c.l.b16 %v556
        %v703 = vunpack.c.h.b16 %v556
        %v704 = vunpack.c.l.b16 %v557
        %v705 = vunpack.c.h.b16 %v557
        %v706 = vunpack.c.l.b16 %v558
        %v707 = vunpack.c.h.b16 %v558
        %v708 = vunpack.c.l.b16 %v559
        %v709 = vunpack.c.h.b16 %v559
        %v710 = vunpack.c.l.b16 %v560
        %v711 = vunpack.c.h.b16 %v560
        %v712 = vunpack.c.l.b16 %v561
        %v713 = vunpack.c.h.b16 %v561
        %v714 = vunpack.c.l.b16 %v562
        %v715 = vunpack.c.h.b16 %v562
        %v716 = vunpack.c.l.b16 %v563
        %v717 = vunpack.c.h.b16 %v563
        %v718 = vunpack.c.l.b16 %v564
        %v719 = vunpack.c.h.b16 %v564
        %v720 = vunpack.c.l.b16 %v565
        %v721 = vunpack.c.h.b16 %v565
        %v722 = vunpack.c.l.b16 %v566
        %v723 = vunpack.c.h.b16 %v566
        %v724 = vunpack.c.l.b16 %v567
        %v725 = vunpack.c.h.b16 %v567
        %v726 = vunpack.c.l.b16 %v568
        %v727 = vunpack.c.h.b16 %v568
        %v728 = vunpack.c.l.b16 %v569
        %v729 = vunpack.c.h.b16 %v569
        %v730 = vunpack.c.l.b16 %v570
        %v731 = vunpack.c.h.b16 %v570
        %v732 = vunpack.c.l.b16 %v571
        %v733 = vunpack.c.h.b16 %v571
        %v734 = vunpack.c.l.b16 %v572
        %v735 = vunpack.c.h.b16 %v572
        %v736 = vunpack.c.l.b16 %v573
        %v737 = vunpack.c.h.b16 %v573
        %v738 = vunpack.c.l.b16 %v574
        %v739 = vunpack.c.h.b16 %v574
        %v740 = vunpack.c.l.b16 %v575
        %v741 = vunpack.c.h.b16 %v575
        %v742 = vunpack.c.l.b16 %v576
        %v743 = vunpack.c.h.b16 %v576
        %v744 = vunpack.c.l.b16 %v577
        %v745 = vunpack.c.h.b16 %v577
        %v746 = vunpack.c.l.b16 %v578
        %v747 = vunpack.c.h.b16 %v578
        %v748 = vunpack.c.l.b16 %v579
        %v749 = vunpack.c.h.b16 %v579
        %v750 = vunpack.c.l.b16 %v580
        %v751 = vunpack.c.h.b16 %v580
        %v752 = vunpack.c.l.b16 %v581
        %v753 = vunpack.c.h.b16 %v581
        %v754 = vunpack.c.l.b16 %v582
        %v755 = vunpack.c.h.b16 %v582
        %v756 = vunpack.c.l.b16 %v583
        %v757 = vunpack.c.h.b16 %v583
        %v758 = vunpack.c.l.b16 %v584
        %v759 = vunpack.c.h.b16 %v584
        %v760 = vunpack.c.l.b16 %v585
        %v761 = vunpack.c.h.b16 %v585
        %v762 = vpack.c.b16 %v700, %v698
        %v763 = vpack.c.b16 %v701, %v699
        %v764 = vpack.c.b16 %v704, %v702
        %v765 = vpack.c.b16 %v705, %v703
        %v766 = vpack.c.b16 %v708, %v706
        %v767 = vpack.c.b16 %v709, %v707
        %v768 = vpack.c.b16 %v712, %v710
        %v769 = vpack.c.b16 %v713, %v711
        %v770 = vpack.c.b16 %v716, %v714
        %v771 = vpack.c.b16 %v717, %v715
        %v772 = vpack.c.b16 %v720, %v718
        %v773 = vpack.c.b16 %v721, %v719
        %v774 = vpack.c.b16 %v724, %v722
        %v775 = vpack.c.b16 %v725, %v723
        %v776 = vpack.c.b16 %v728, %v726
        %v777 = vpack.c.b16 %v729, %v727
        %v778 = vpack.c.b16 %v732, %v730
        %v779 = vpack.c.b16 %v733, %v731
        %v780 = vpack.c.b16 %v736, %v734
        %v781 = vpack.c.b16 %v737, %v735
        %v782 = vpack.c.b16 %v740, %v738
        %v783 = vpack.c.b16 %v741, %v739
        %v784 = vpack.c.b16 %v744, %v742
        %v785 = vpack.c.b16 %v745, %v743
        %v786 = vpack.c.b16 %v748, %v746
        %v787 = vpack.c.b16 %v749, %v747
        %v788 = vpack.c.b16 %v752, %v750
        %v789 = vpack.c.b16 %v753, %v751
        %v790 = vpack.c.b16 %v756, %v754
        %v791 = vpack.c.b16 %v757, %v755
        %v792 = vpack.c.b16 %v760, %v758
        %v793 = vpack.c.b16 %v761, %v759
        %826 = vmatprep.subr.bf16.mxu0 %v777
        %827 = vmatpush1.bf16.xpose.msra.mxu0 %v776
        %828 = vmatprep.subr.bf16.mxu0 %v775
        %829 = vmatpush1.bf16.xpose.msra.mxu0 %v774
        %830 = vmatprep.subr.bf16.mxu0 %v773
        %831 = vmatpush1.bf16.xpose.msra.mxu0 %v772
        %832 = vmatprep.subr.bf16.mxu0 %v771
        %833 = vmatpush1.bf16.xpose.msra.mxu0 %v770
        %834 = vmatprep.subr.bf16.mxu0 %v769
        %835 = vmatpush1.bf16.xpose.msra.mxu0 %v768
        %836 = vmatprep.subr.bf16.mxu0 %v767
        %837 = vmatpush1.bf16.xpose.msra.mxu0 %v766
        %838 = vmatprep.subr.bf16.mxu0 %v765
        %839 = vmatpush1.bf16.xpose.msra.mxu0 %v764
        %840 = vmatprep.subr.bf16.mxu0 %v763
        %841 = vmatpush1.bf16.xpose.msra.mxu0 %v762
        %842 = vmatprep.subr.bf16.mxu0 %v793
        %843 = vmatpush2.bf16.xpose.msra.mxu0 %v792
        %844 = vmatprep.subr.bf16.mxu0 %v791
        %845 = vmatpush2.bf16.xpose.msra.mxu0 %v790
        %846 = vmatprep.subr.bf16.mxu0 %v789
        %847 = vmatpush2.bf16.xpose.msra.mxu0 %v788
        %848 = vmatprep.subr.bf16.mxu0 %v787
        %849 = vmatpush2.bf16.xpose.msra.mxu0 %v786
        %850 = vmatprep.subr.bf16.mxu0 %v785
        %851 = vmatpush2.bf16.xpose.msra.mxu0 %v784
        %852 = vmatprep.subr.bf16.mxu0 %v783
        %853 = vmatpush2.bf16.xpose.msra.mxu0 %v782
        %854 = vmatprep.subr.bf16.mxu0 %v781
        %855 = vmatpush2.bf16.xpose.msra.mxu0 %v780
        %856 = vmatprep.subr.bf16.mxu0 %v779
        %857 = vmatpush2.bf16.xpose.msra.mxu0 %v778
        %858 = vmatprep.mubr.bf16.mxu0 %v635
        %859 = vmatmul.mubr.bf16.gmra.mxu0 %v634
        %v860 = vpop.f32.mrf.mxu0
        %v861 = vadd.f32 0.0, %v860
        %v862 = vpop.f32.mrf.mxu0
        %v863 = vadd.f32 0.0, %v862
        %v864 = vpop.f32.mrf.mxu0
        %v865 = vadd.f32 0.0, %v864
        %v866 = vpop.f32.mrf.mxu0
        %v867 = vadd.f32 0.0, %v866
        %868 = vmatprep.mubr.bf16.mxu0 %v637
        %869 = vmatmul.mubr.bf16.gmra.mxu0 %v636
        %v870 = vpop.f32.mrf.mxu0
        %v871 = vadd.f32 0.0, %v870
        %v872 = vpop.f32.mrf.mxu0
        %v873 = vadd.f32 0.0, %v872
        %v874 = vpop.f32.mrf.mxu0
        %v875 = vadd.f32 0.0, %v874
        %v876 = vpop.f32.mrf.mxu0
        %v877 = vadd.f32 0.0, %v876
        %878 = vmatprep.mubr.bf16.mxu0 %v639
        %879 = vmatmul.mubr.bf16.gmra.mxu0 %v638
        %v880 = vpop.f32.mrf.mxu0
        %v881 = vadd.f32 0.0, %v880
        %v882 = vpop.f32.mrf.mxu0
        %v883 = vadd.f32 0.0, %v882
        %v884 = vpop.f32.mrf.mxu0
        %v885 = vadd.f32 0.0, %v884
        %v886 = vpop.f32.mrf.mxu0
        %v887 = vadd.f32 0.0, %v886
        %888 = vmatprep.mubr.bf16.mxu0 %v641
        %889 = vmatmul.mubr.bf16.gmra.mxu0 %v640
        %v890 = vpop.f32.mrf.mxu0
        %v891 = vadd.f32 0.0, %v890
        %v892 = vpop.f32.mrf.mxu0
        %v893 = vadd.f32 0.0, %v892
        %v894 = vpop.f32.mrf.mxu0
        %v895 = vadd.f32 0.0, %v894
        %v896 = vpop.f32.mrf.mxu0
        %v897 = vadd.f32 0.0, %v896
        %898 = vmatprep.mubr.bf16.mxu0 %v643
        %899 = vmatmul.mubr.bf16.gmra.mxu0 %v642
        %v900 = vpop.f32.mrf.mxu0
        %v901 = vadd.f32 0.0, %v900
        %v902 = vpop.f32.mrf.mxu0
        %v903 = vadd.f32 0.0, %v902
        %v904 = vpop.f32.mrf.mxu0
        %v905 = vadd.f32 0.0, %v904
        %v906 = vpop.f32.mrf.mxu0
        %v907 = vadd.f32 0.0, %v906
        %908 = vmatprep.mubr.bf16.mxu0 %v645
        %909 = vmatmul.mubr.bf16.gmra.mxu0 %v644
        %v910 = vpop.f32.mrf.mxu0
        %v911 = vadd.f32 0.0, %v910
        %v912 = vpop.f32.mrf.mxu0
        %v913 = vadd.f32 0.0, %v912
        %v914 = vpop.f32.mrf.mxu0
        %v915 = vadd.f32 0.0, %v914
        %v916 = vpop.f32.mrf.mxu0
        %v917 = vadd.f32 0.0, %v916
        %918 = vmatprep.mubr.bf16.mxu0 %v647
        %919 = vmatmul.mubr.bf16.gmra.mxu0 %v646
        %v920 = vpop.f32.mrf.mxu0
        %v921 = vadd.f32 0.0, %v920
        %v922 = vpop.f32.mrf.mxu0
        %v923 = vadd.f32 0.0, %v922
        %v924 = vpop.f32.mrf.mxu0
        %v925 = vadd.f32 0.0, %v924
        %v926 = vpop.f32.mrf.mxu0
        %v927 = vadd.f32 0.0, %v926
        %928 = vmatprep.mubr.bf16.mxu0 %v649
        %929 = vmatmul.mubr.bf16.gmra.mxu0 %v648
        %v930 = vpop.f32.mrf.mxu0
        %v931 = vadd.f32 0.0, %v930
        %v932 = vpop.f32.mrf.mxu0
        %v933 = vadd.f32 0.0, %v932
        %v934 = vpop.f32.mrf.mxu0
        %v935 = vadd.f32 0.0, %v934
        %v936 = vpop.f32.mrf.mxu0
        %v937 = vadd.f32 0.0, %v936
        %938 = vdwg.mxu0
        %v939 = vadd.f32 %v522, %v861
        %v940 = vadd.f32 %v523, %v863
        %v941 = vadd.f32 %v524, %v865
        %v942 = vadd.f32 %v525, %v867
        %v943 = vadd.f32 %v526, %v871
        %v944 = vadd.f32 %v527, %v873
        %v945 = vadd.f32 %v528, %v875
        %v946 = vadd.f32 %v529, %v877
        %v947 = vadd.f32 %v530, %v881
        %v948 = vadd.f32 %v531, %v883
        %v949 = vadd.f32 %v532, %v885
        %v950 = vadd.f32 %v533, %v887
        %v951 = vadd.f32 %v534, %v891
        %v952 = vadd.f32 %v535, %v893
        %v953 = vadd.f32 %v536, %v895
        %v954 = vadd.f32 %v537, %v897
        %v955 = vadd.f32 %v538, %v901
        %v956 = vadd.f32 %v539, %v903
        %v957 = vadd.f32 %v540, %v905
        %v958 = vadd.f32 %v541, %v907
        %v959 = vadd.f32 %v542, %v911
        %v960 = vadd.f32 %v543, %v913
        %v961 = vadd.f32 %v544, %v915
        %v962 = vadd.f32 %v545, %v917
        %v963 = vadd.f32 %v546, %v921
        %v964 = vadd.f32 %v547, %v923
        %v965 = vadd.f32 %v548, %v925
        %v966 = vadd.f32 %v549, %v927
        %v967 = vadd.f32 %v550, %v931
        %v968 = vadd.f32 %v551, %v933
        %v969 = vadd.f32 %v552, %v935
        %v970 = vadd.f32 %v553, %v937
        %971 = vst [vmem:[#allocation2] sm:$0xff] %v939
        %972 = vst [vmem:[#allocation2 + $0x8] sm:$0xff] %v940
        %973 = vst [vmem:[#allocation2 + $0x10] sm:$0xff] %v941
        %974 = vst [vmem:[#allocation2 + $0x18] sm:$0xff] %v942
        %975 = vst [vmem:[#allocation2 + $0x20] sm:$0xff] %v943
        %976 = vst [vmem:[#allocation2 + $0x28] sm:$0xff] %v944
        %977 = vst [vmem:[#allocation2 + $0x30] sm:$0xff] %v945
        %978 = vst [vmem:[#allocation2 + $0x38] sm:$0xff] %v946
        %979 = vst [vmem:[#allocation2 + $0x40] sm:$0xff] %v947
        %980 = vst [vmem:[#allocation2 + $0x48] sm:$0xff] %v948
        %981 = vst [vmem:[#allocation2 + $0x50] sm:$0xff] %v949
        %982 = vst [vmem:[#allocation2 + $0x58] sm:$0xff] %v950
        %983 = vst [vmem:[#allocation2 + $0x60] sm:$0xff] %v951
        %984 = vst [vmem:[#allocation2 + $0x68] sm:$0xff] %v952
        %985 = vst [vmem:[#allocation2 + $0x70] sm:$0xff] %v953
        %986 = vst [vmem:[#allocation2 + $0x78] sm:$0xff] %v954
        %987 = vst [vmem:[#allocation2 + $0x80] sm:$0xff] %v955
        %988 = vst [vmem:[#allocation2 + $0x88] sm:$0xff] %v956
        %989 = vst [vmem:[#allocation2 + $0x90] sm:$0xff] %v957
        %990 = vst [vmem:[#allocation2 + $0x98] sm:$0xff] %v958
        %991 = vst [vmem:[#allocation2 + $0xa0] sm:$0xff] %v959
        %992 = vst [vmem:[#allocation2 + $0xa8] sm:$0xff] %v960
        %993 = vst [vmem:[#allocation2 + $0xb0] sm:$0xff] %v961
        %994 = vst [vmem:[#allocation2 + $0xb8] sm:$0xff] %v962
        %995 = vst [vmem:[#allocation2 + $0xc0] sm:$0xff] %v963
        %996 = vst [vmem:[#allocation2 + $0xc8] sm:$0xff] %v964
        %997 = vst [vmem:[#allocation2 + $0xd0] sm:$0xff] %v965
        %998 = vst [vmem:[#allocation2 + $0xd8] sm:$0xff] %v966
        %999 = vst [vmem:[#allocation2 + $0xe0] sm:$0xff] %v967
        %1000 = vst [vmem:[#allocation2 + $0xe8] sm:$0xff] %v968
        %1001 = vst [vmem:[#allocation2 + $0xf0] sm:$0xff] %v969
        %1002 = vst [vmem:[#allocation2 + $0xf8] sm:$0xff] %v970
        %v1003 = vld [vmem:[#allocation3] sm:$0xff]
        %v1004 = vld [vmem:[#allocation3 + $0x8] sm:$0xff]
        %v1005 = vld [vmem:[#allocation3 + $0x10] sm:$0xff]
        %v1006 = vld [vmem:[#allocation3 + $0x18] sm:$0xff]
        %v1007 = vld [vmem:[#allocation3 + $0x20] sm:$0xff]
        %v1008 = vld [vmem:[#allocation3 + $0x28] sm:$0xff]
        %v1009 = vld [vmem:[#allocation3 + $0x30] sm:$0xff]
        %v1010 = vld [vmem:[#allocation3 + $0x38] sm:$0xff]
        %v1011 = vld [vmem:[#allocation3 + $0x40] sm:$0xff]
        %v1012 = vld [vmem:[#allocation3 + $0x48] sm:$0xff]
        %v1013 = vld [vmem:[#allocation3 + $0x50] sm:$0xff]
        %v1014 = vld [vmem:[#allocation3 + $0x58] sm:$0xff]
        %v1015 = vld [vmem:[#allocation3 + $0x60] sm:$0xff]
        %v1016 = vld [vmem:[#allocation3 + $0x68] sm:$0xff]
        %v1017 = vld [vmem:[#allocation3 + $0x70] sm:$0xff]
        %v1018 = vld [vmem:[#allocation3 + $0x78] sm:$0xff]
        %v1019 = vld [vmem:[%s442] sm:$0xf]
        %v1020 = vld [vmem:[%s442 + $0x4] sm:$0xf]
        %v1021 = vld [vmem:[%s442 + $0x8] sm:$0xf]
        %v1022 = vld [vmem:[%s442 + $0xc] sm:$0xf]
        %v1023 = vld [vmem:[%s442 + $0x10] sm:$0xf]
        %v1024 = vld [vmem:[%s442 + $0x14] sm:$0xf]
        %v1025 = vld [vmem:[%s442 + $0x18] sm:$0xf]
        %v1026 = vld [vmem:[%s442 + $0x1c] sm:$0xf]
        %v1027 = vld [vmem:[%s442 + $0x20] sm:$0xf]
        %v1028 = vld [vmem:[%s442 + $0x24] sm:$0xf]
        %v1029 = vld [vmem:[%s442 + $0x28] sm:$0xf]
        %v1030 = vld [vmem:[%s442 + $0x2c] sm:$0xf]
        %v1031 = vld [vmem:[%s442 + $0x30] sm:$0xf]
        %v1032 = vld [vmem:[%s442 + $0x34] sm:$0xf]
        %v1033 = vld [vmem:[%s442 + $0x38] sm:$0xf]
        %v1034 = vld [vmem:[%s442 + $0x3c] sm:$0xf]
        %v1035 = vld [vmem:[%s442 + $0x40] sm:$0xf]
        %v1036 = vld [vmem:[%s442 + $0x44] sm:$0xf]
        %v1037 = vld [vmem:[%s442 + $0x48] sm:$0xf]
        %v1038 = vld [vmem:[%s442 + $0x4c] sm:$0xf]
        %v1039 = vld [vmem:[%s442 + $0x50] sm:$0xf]
        %v1040 = vld [vmem:[%s442 + $0x54] sm:$0xf]
        %v1041 = vld [vmem:[%s442 + $0x58] sm:$0xf]
        %v1042 = vld [vmem:[%s442 + $0x5c] sm:$0xf]
        %v1043 = vld [vmem:[%s442 + $0x60] sm:$0xf]
        %v1044 = vld [vmem:[%s442 + $0x64] sm:$0xf]
        %v1045 = vld [vmem:[%s442 + $0x68] sm:$0xf]
        %v1046 = vld [vmem:[%s442 + $0x6c] sm:$0xf]
        %v1047 = vld [vmem:[%s442 + $0x70] sm:$0xf]
        %v1048 = vld [vmem:[%s442 + $0x74] sm:$0xf]
        %v1049 = vld [vmem:[%s442 + $0x78] sm:$0xf]
        %v1050 = vld [vmem:[%s442 + $0x7c] sm:$0xf]
        %v1083 = vunpack.c.l.b16 %v1019
        %v1084 = vunpack.c.l.b16 %v1020
        %v1085 = vunpack.c.l.b16 %v1021
        %v1086 = vunpack.c.l.b16 %v1022
        %v1087 = vunpack.c.l.b16 %v1023
        %v1088 = vunpack.c.l.b16 %v1024
        %v1089 = vunpack.c.l.b16 %v1025
        %v1090 = vunpack.c.l.b16 %v1026
        %v1091 = vunpack.c.l.b16 %v1027
        %v1092 = vunpack.c.l.b16 %v1028
        %v1093 = vunpack.c.l.b16 %v1029
        %v1094 = vunpack.c.l.b16 %v1030
        %v1095 = vunpack.c.l.b16 %v1031
        %v1096 = vunpack.c.l.b16 %v1032
        %v1097 = vunpack.c.l.b16 %v1033
        %v1098 = vunpack.c.l.b16 %v1034
        %v1099 = vunpack.c.l.b16 %v1035
        %v1100 = vunpack.c.l.b16 %v1036
        %v1101 = vunpack.c.l.b16 %v1037
        %v1102 = vunpack.c.l.b16 %v1038
        %v1103 = vunpack.c.l.b16 %v1039
        %v1104 = vunpack.c.l.b16 %v1040
        %v1105 = vunpack.c.l.b16 %v1041
        %v1106 = vunpack.c.l.b16 %v1042
        %v1107 = vunpack.c.l.b16 %v1043
        %v1108 = vunpack.c.l.b16 %v1044
        %v1109 = vunpack.c.l.b16 %v1045
        %v1110 = vunpack.c.l.b16 %v1046
        %v1111 = vunpack.c.l.b16 %v1047
        %v1112 = vunpack.c.l.b16 %v1048
        %v1113 = vunpack.c.l.b16 %v1049
        %v1114 = vunpack.c.l.b16 %v1050
        %v1115 = vpack.c.b16 %v1084, %v1083
        %v1116 = vpack.c.b16 %v1086, %v1085
        %v1117 = vpack.c.b16 %v1088, %v1087
        %v1118 = vpack.c.b16 %v1090, %v1089
        %v1119 = vpack.c.b16 %v1092, %v1091
        %v1120 = vpack.c.b16 %v1094, %v1093
        %v1121 = vpack.c.b16 %v1096, %v1095
        %v1122 = vpack.c.b16 %v1098, %v1097
        %v1123 = vpack.c.b16 %v1100, %v1099
        %v1124 = vpack.c.b16 %v1102, %v1101
        %v1125 = vpack.c.b16 %v1104, %v1103
        %v1126 = vpack.c.b16 %v1106, %v1105
        %v1127 = vpack.c.b16 %v1108, %v1107
        %v1128 = vpack.c.b16 %v1110, %v1109
        %v1129 = vpack.c.b16 %v1112, %v1111
        %v1130 = vpack.c.b16 %v1114, %v1113
        %1147 = vmatprep.subr.bf16.mxu0 0
        %1148 = vmatpush1.bf16.msra.mxu0 %v1122
        %1149 = vmatprep.subr.bf16.mxu0 0
        %1150 = vmatpush1.bf16.msra.mxu0 %v1121
        %1151 = vmatprep.subr.bf16.mxu0 0
        %1152 = vmatpush1.bf16.msra.mxu0 %v1120
        %1153 = vmatprep.subr.bf16.mxu0 0
        %1154 = vmatpush1.bf16.msra.mxu0 %v1119
        %1155 = vmatprep.subr.bf16.mxu0 0
        %1156 = vmatpush1.bf16.msra.mxu0 %v1118
        %1157 = vmatprep.subr.bf16.mxu0 0
        %1158 = vmatpush1.bf16.msra.mxu0 %v1117
        %1159 = vmatprep.subr.bf16.mxu0 0
        %1160 = vmatpush1.bf16.msra.mxu0 %v1116
        %1161 = vmatprep.subr.bf16.mxu0 0
        %1162 = vmatpush1.bf16.msra.mxu0 %v1115
        %1163 = vmatprep.subr.bf16.mxu0 0
        %1164 = vmatpush2.bf16.msra.mxu0 %v1130
        %1165 = vmatprep.subr.bf16.mxu0 0
        %1166 = vmatpush2.bf16.msra.mxu0 %v1129
        %1167 = vmatprep.subr.bf16.mxu0 0
        %1168 = vmatpush2.bf16.msra.mxu0 %v1128
        %1169 = vmatprep.subr.bf16.mxu0 0
        %1170 = vmatpush2.bf16.msra.mxu0 %v1127
        %1171 = vmatprep.subr.bf16.mxu0 0
        %1172 = vmatpush2.bf16.msra.mxu0 %v1126
        %1173 = vmatprep.subr.bf16.mxu0 0
        %1174 = vmatpush2.bf16.msra.mxu0 %v1125
        %1175 = vmatprep.subr.bf16.mxu0 0
        %1176 = vmatpush2.bf16.msra.mxu0 %v1124
        %1177 = vmatprep.subr.bf16.mxu0 0
        %1178 = vmatpush2.bf16.msra.mxu0 %v1123
        %1179 = vmatprep.mubr.bf16.mxu0 %v635
        %1180 = vmatmul.mubr.bf16.gmra.mxu0 %v634
        %v1181 = vpop.f32.mrf.mxu0
        %v1182 = vadd.f32 0.0, %v1181
        %v1183 = vpop.f32.mrf.mxu0
        %v1184 = vpop.f32.mrf.mxu0
        %v1185 = vadd.f32 0.0, %v1184
        %v1186 = vpop.f32.mrf.mxu0
        %1187 = vmatprep.mubr.bf16.mxu0 %v637
        %1188 = vmatmul.mubr.bf16.gmra.mxu0 %v636
        %v1189 = vpop.f32.mrf.mxu0
        %v1190 = vadd.f32 0.0, %v1189
        %v1191 = vpop.f32.mrf.mxu0
        %v1192 = vpop.f32.mrf.mxu0
        %v1193 = vadd.f32 0.0, %v1192
        %v1194 = vpop.f32.mrf.mxu0
        %1195 = vmatprep.mubr.bf16.mxu0 %v639
        %1196 = vmatmul.mubr.bf16.gmra.mxu0 %v638
        %v1197 = vpop.f32.mrf.mxu0
        %v1198 = vadd.f32 0.0, %v1197
        %v1199 = vpop.f32.mrf.mxu0
        %v1200 = vpop.f32.mrf.mxu0
        %v1201 = vadd.f32 0.0, %v1200
        %v1202 = vpop.f32.mrf.mxu0
        %1203 = vmatprep.mubr.bf16.mxu0 %v641
        %1204 = vmatmul.mubr.bf16.gmra.mxu0 %v640
        %v1205 = vpop.f32.mrf.mxu0
        %v1206 = vadd.f32 0.0, %v1205
        %v1207 = vpop.f32.mrf.mxu0
        %v1208 = vpop.f32.mrf.mxu0
        %v1209 = vadd.f32 0.0, %v1208
        %v1210 = vpop.f32.mrf.mxu0
        %1211 = vmatprep.mubr.bf16.mxu0 %v643
        %1212 = vmatmul.mubr.bf16.gmra.mxu0 %v642
        %v1213 = vpop.f32.mrf.mxu0
        %v1214 = vadd.f32 0.0, %v1213
        %v1215 = vpop.f32.mrf.mxu0
        %v1216 = vpop.f32.mrf.mxu0
        %v1217 = vadd.f32 0.0, %v1216
        %v1218 = vpop.f32.mrf.mxu0
        %1219 = vmatprep.mubr.bf16.mxu0 %v645
        %1220 = vmatmul.mubr.bf16.gmra.mxu0 %v644
        %v1221 = vpop.f32.mrf.mxu0
        %v1222 = vadd.f32 0.0, %v1221
        %v1223 = vpop.f32.mrf.mxu0
        %v1224 = vpop.f32.mrf.mxu0
        %v1225 = vadd.f32 0.0, %v1224
        %v1226 = vpop.f32.mrf.mxu0
        %1227 = vmatprep.mubr.bf16.mxu0 %v647
        %1228 = vmatmul.mubr.bf16.gmra.mxu0 %v646
        %v1229 = vpop.f32.mrf.mxu0
        %v1230 = vadd.f32 0.0, %v1229
        %v1231 = vpop.f32.mrf.mxu0
        %v1232 = vpop.f32.mrf.mxu0
        %v1233 = vadd.f32 0.0, %v1232
        %v1234 = vpop.f32.mrf.mxu0
        %1235 = vmatprep.mubr.bf16.mxu0 %v649
        %1236 = vmatmul.mubr.bf16.gmra.mxu0 %v648
        %v1237 = vpop.f32.mrf.mxu0
        %v1238 = vadd.f32 0.0, %v1237
        %v1239 = vpop.f32.mrf.mxu0
        %v1240 = vpop.f32.mrf.mxu0
        %v1241 = vadd.f32 0.0, %v1240
        %v1242 = vpop.f32.mrf.mxu0
        %1243 = vdwg.mxu0
        %v1244 = vadd.f32 %v1003, %v1182
        %v1245 = vadd.f32 %v1004, %v1185
        %v1246 = vadd.f32 %v1005, %v1190
        %v1247 = vadd.f32 %v1006, %v1193
        %v1248 = vadd.f32 %v1007, %v1198
        %v1249 = vadd.f32 %v1008, %v1201
        %v1250 = vadd.f32 %v1009, %v1206
        %v1251 = vadd.f32 %v1010, %v1209
        %v1252 = vadd.f32 %v1011, %v1214
        %v1253 = vadd.f32 %v1012, %v1217
        %v1254 = vadd.f32 %v1013, %v1222
        %v1255 = vadd.f32 %v1014, %v1225
        %v1256 = vadd.f32 %v1015, %v1230
        %v1257 = vadd.f32 %v1016, %v1233
        %v1258 = vadd.f32 %v1017, %v1238
        %v1259 = vadd.f32 %v1018, %v1241
        %vm1260 = vcmask 31744
        %1261 = vst.msk [vmem:[#allocation3] sm:$0xff] %vm1260, %v1244
        %1262 = vst.msk [vmem:[#allocation3 + $0x8] sm:$0xff] %vm1260, %v1245
        %1263 = vst.msk [vmem:[#allocation3 + $0x10] sm:$0xff] %vm1260, %v1246
        %1264 = vst.msk [vmem:[#allocation3 + $0x18] sm:$0xff] %vm1260, %v1247
        %1265 = vst.msk [vmem:[#allocation3 + $0x20] sm:$0xff] %vm1260, %v1248
        %1266 = vst.msk [vmem:[#allocation3 + $0x28] sm:$0xff] %vm1260, %v1249
        %1267 = vst.msk [vmem:[#allocation3 + $0x30] sm:$0xff] %vm1260, %v1250
        %1268 = vst.msk [vmem:[#allocation3 + $0x38] sm:$0xff] %vm1260, %v1251
        %1269 = vst.msk [vmem:[#allocation3 + $0x40] sm:$0xff] %vm1260, %v1252
        %1270 = vst.msk [vmem:[#allocation3 + $0x48] sm:$0xff] %vm1260, %v1253
        %1271 = vst.msk [vmem:[#allocation3 + $0x50] sm:$0xff] %vm1260, %v1254
        %1272 = vst.msk [vmem:[#allocation3 + $0x58] sm:$0xff] %vm1260, %v1255
        %1273 = vst.msk [vmem:[#allocation3 + $0x60] sm:$0xff] %vm1260, %v1256
        %1274 = vst.msk [vmem:[#allocation3 + $0x68] sm:$0xff] %vm1260, %v1257
        %1275 = vst.msk [vmem:[#allocation3 + $0x70] sm:$0xff] %vm1260, %v1258
        %1276 = vst.msk [vmem:[#allocation3 + $0x78] sm:$0xff] %vm1260, %v1259
        %p1277 = scmp.eq.s32.totalorder %s27, 1
        // Predicated region
        $region87: #{tpu_custom_call.1} parent=73 // pred_check
          %p1278 = pneg %p1277
        $region88: #{tpu_custom_call.1} parent=73 // pred_check_branch
          %1280 = sbr.rel (%p1278) target = $region90
        $region89: #{tpu_custom_call.1} parent=73 // pred_region
          %v1281 = vld [vmem:[#allocation3] sm:$0xff]
          %v1282 = vld [vmem:[#allocation3 + $0x8] sm:$0xff]
          %v1283 = vld [vmem:[#allocation3 + $0x10] sm:$0xff]
          %v1284 = vld [vmem:[#allocation3 + $0x18] sm:$0xff]
          %v1285 = vld [vmem:[#allocation3 + $0x20] sm:$0xff]
          %v1286 = vld [vmem:[#allocation3 + $0x28] sm:$0xff]
          %v1287 = vld [vmem:[#allocation3 + $0x30] sm:$0xff]
          %v1288 = vld [vmem:[#allocation3 + $0x38] sm:$0xff]
          %v1289 = vld [vmem:[#allocation3 + $0x40] sm:$0xff]
          %v1290 = vld [vmem:[#allocation3 + $0x48] sm:$0xff]
          %v1291 = vld [vmem:[#allocation3 + $0x50] sm:$0xff]
          %v1292 = vld [vmem:[#allocation3 + $0x58] sm:$0xff]
          %v1293 = vld [vmem:[#allocation3 + $0x60] sm:$0xff]
          %v1294 = vld [vmem:[#allocation3 + $0x68] sm:$0xff]
          %v1295 = vld [vmem:[#allocation3 + $0x70] sm:$0xff]
          %v1296 = vld [vmem:[#allocation3 + $0x78] sm:$0xff]
          %v1297 = vpack.c.bf16 %v1282, %v1281
          %v1298 = vpack.c.bf16 %v1284, %v1283
          %v1299 = vpack.c.bf16 %v1286, %v1285
          %v1300 = vpack.c.bf16 %v1288, %v1287
          %v1301 = vpack.c.bf16 %v1290, %v1289
          %v1302 = vpack.c.bf16 %v1292, %v1291
          %v1303 = vpack.c.bf16 %v1294, %v1293
          %v1304 = vpack.c.bf16 %v1296, %v1295
          %v1305 = vld [vmem:[%s448] sm:$0xf]
          %v1308 = vunpack.c.l.s4 1983009808
          %v1309 = vunpack.c.0.s8 %v1308
          %v1310 = vlaneseq
          %v1311 = vshrl.u32 %v1310, 7
          %v1312 = vsub.s32 %v1309, %v1311
          %v1313 = vrot.slane %v1305, %v1312
          %v1314 = vcombine.high %v1313, %v1313
          %v1316 = vsel %vm1260, %v1297, 0
          %v1319 = vsel %vm1260, %v1298, 0
          %v1322 = vsel %vm1260, %v1299, 0
          %v1325 = vsel %vm1260, %v1300, 0
          %v1328 = vsel %vm1260, %v1301, 0
          %v1331 = vsel %vm1260, %v1302, 0
          %v1334 = vsel %vm1260, %v1303, 0
          %v1337 = vsel %vm1260, %v1304, 0
          %vm1339 = vcmask 1041408
          %v1341 = vsel %vm1339, %v1313, 0
          %v1344 = vsel %vm1339, %v1314, 0
          %1346 = vmatprep.subr.bf16.mxu0 0
          %1347 = vmatpush1.bf16.msra.mxu0 0
          %1348 = vmatprep.subr.bf16.mxu0 0
          %1349 = vmatpush1.bf16.msra.mxu0 0
          %1350 = vmatprep.subr.bf16.mxu0 0
          %1351 = vmatpush1.bf16.msra.mxu0 0
          %1352 = vmatprep.subr.bf16.mxu0 0
          %1353 = vmatpush1.bf16.msra.mxu0 0
          %1354 = vmatprep.subr.bf16.mxu0 0
          %1355 = vmatpush1.bf16.msra.mxu0 0
          %1356 = vmatprep.subr.bf16.mxu0 0
          %1357 = vmatpush1.bf16.msra.mxu0 0
          %1358 = vmatprep.subr.bf16.mxu0 0
          %1359 = vmatpush1.bf16.msra.mxu0 0
          %1360 = vmatprep.subr.bf16.mxu0 %v1344
          %1361 = vmatpush1.bf16.msra.mxu0 %v1341
          %1362 = vmatprep.subr.bf16.mxu0 0
          %1363 = vmatpush2.bf16.msra.mxu0 0
          %1364 = vmatprep.subr.bf16.mxu0 0
          %1365 = vmatpush2.bf16.msra.mxu0 0
          %1366 = vmatprep.subr.bf16.mxu0 0
          %1367 = vmatpush2.bf16.msra.mxu0 0
          %1368 = vmatprep.subr.bf16.mxu0 0
          %1369 = vmatpush2.bf16.msra.mxu0 0
          %1370 = vmatprep.subr.bf16.mxu0 0
          %1371 = vmatpush2.bf16.msra.mxu0 0
          %1372 = vmatprep.subr.bf16.mxu0 0
          %1373 = vmatpush2.bf16.msra.mxu0 0
          %1374 = vmatprep.subr.bf16.mxu0 0
          %1375 = vmatpush2.bf16.msra.mxu0 0
          %1376 = vmatprep.subr.bf16.mxu0 0
          %1377 = vmatpush2.bf16.msra.mxu0 0
          %1378 = vmatprep.mubr.bf16.mxu0 0
          %1379 = vmatmul.mubr.bf16.gmra.mxu0 %v1316
          %v1380 = vpop.f32.mrf.mxu0
          %v1381 = vadd.f32 0.0, %v1380
          %v1382 = vpop.f32.mrf.mxu0
          %v1383 = vadd.f32 0.0, %v1382
          %v1384 = vpop.f32.mrf.mxu0
          %v1385 = vadd.f32 0.0, %v1384
          %v1386 = vpop.f32.mrf.mxu0
          %v1387 = vadd.f32 0.0, %v1386
          %1388 = vmatprep.mubr.bf16.mxu0 0
          %1389 = vmatmul.mubr.bf16.gmra.mxu0 %v1319
          %v1390 = vpop.f32.mrf.mxu0
          %v1391 = vadd.f32 0.0, %v1390
          %v1392 = vpop.f32.mrf.mxu0
          %v1393 = vadd.f32 0.0, %v1392
          %v1394 = vpop.f32.mrf.mxu0
          %v1395 = vadd.f32 0.0, %v1394
          %v1396 = vpop.f32.mrf.mxu0
          %v1397 = vadd.f32 0.0, %v1396
          %1398 = vmatprep.mubr.bf16.mxu0 0
          %1399 = vmatmul.mubr.bf16.gmra.mxu0 %v1322
          %v1400 = vpop.f32.mrf.mxu0
          %v1401 = vadd.f32 0.0, %v1400
          %v1402 = vpop.f32.mrf.mxu0
          %v1403 = vadd.f32 0.0, %v1402
          %v1404 = vpop.f32.mrf.mxu0
          %v1405 = vadd.f32 0.0, %v1404
          %v1406 = vpop.f32.mrf.mxu0
          %v1407 = vadd.f32 0.0, %v1406
          %1408 = vmatprep.mubr.bf16.mxu0 0
          %1409 = vmatmul.mubr.bf16.gmra.mxu0 %v1325
          %v1410 = vpop.f32.mrf.mxu0
          %v1411 = vadd.f32 0.0, %v1410
          %v1412 = vpop.f32.mrf.mxu0
          %v1413 = vadd.f32 0.0, %v1412
          %v1414 = vpop.f32.mrf.mxu0
          %v1415 = vadd.f32 0.0, %v1414
          %v1416 = vpop.f32.mrf.mxu0
          %v1417 = vadd.f32 0.0, %v1416
          %1418 = vmatprep.mubr.bf16.mxu0 0
          %1419 = vmatmul.mubr.bf16.gmra.mxu0 %v1328
          %v1420 = vpop.f32.mrf.mxu0
          %v1421 = vadd.f32 0.0, %v1420
          %v1422 = vpop.f32.mrf.mxu0
          %v1423 = vadd.f32 0.0, %v1422
          %v1424 = vpop.f32.mrf.mxu0
          %v1425 = vadd.f32 0.0, %v1424
          %v1426 = vpop.f32.mrf.mxu0
          %v1427 = vadd.f32 0.0, %v1426
          %1428 = vmatprep.mubr.bf16.mxu0 0
          %1429 = vmatmul.mubr.bf16.gmra.mxu0 %v1331
          %v1430 = vpop.f32.mrf.mxu0
          %v1431 = vadd.f32 0.0, %v1430
          %v1432 = vpop.f32.mrf.mxu0
          %v1433 = vadd.f32 0.0, %v1432
          %v1434 = vpop.f32.mrf.mxu0
          %v1435 = vadd.f32 0.0, %v1434
          %v1436 = vpop.f32.mrf.mxu0
          %v1437 = vadd.f32 0.0, %v1436
          %1438 = vmatprep.mubr.bf16.mxu0 0
          %1439 = vmatmul.mubr.bf16.gmra.mxu0 %v1334
          %v1440 = vpop.f32.mrf.mxu0
          %v1441 = vadd.f32 0.0, %v1440
          %v1442 = vpop.f32.mrf.mxu0
          %v1443 = vadd.f32 0.0, %v1442
          %v1444 = vpop.f32.mrf.mxu0
          %v1445 = vadd.f32 0.0, %v1444
          %v1446 = vpop.f32.mrf.mxu0
          %v1447 = vadd.f32 0.0, %v1446
          %1448 = vmatprep.mubr.bf16.mxu0 0
          %1449 = vmatmul.mubr.bf16.gmra.mxu0 %v1337
          %v1450 = vpop.f32.mrf.mxu0
          %v1451 = vadd.f32 0.0, %v1450
          %v1452 = vpop.f32.mrf.mxu0
          %v1453 = vadd.f32 0.0, %v1452
          %v1454 = vpop.f32.mrf.mxu0
          %v1455 = vadd.f32 0.0, %v1454
          %v1456 = vpop.f32.mrf.mxu0
          %v1457 = vadd.f32 0.0, %v1456
          %1458 = vdwg.mxu0
          %v1459 = vmul.f32 %v1381, 2.0
          %v1460 = vmul.f32 %v1383, 2.0
          %v1461 = vmul.f32 %v1385, 2.0
          %v1462 = vmul.f32 %v1387, 2.0
          %v1463 = vmul.f32 %v1391, 2.0
          %v1464 = vmul.f32 %v1393, 2.0
          %v1465 = vmul.f32 %v1395, 2.0
          %v1466 = vmul.f32 %v1397, 2.0
          %v1467 = vmul.f32 %v1401, 2.0
          %v1468 = vmul.f32 %v1403, 2.0
          %v1469 = vmul.f32 %v1405, 2.0
          %v1470 = vmul.f32 %v1407, 2.0
          %v1471 = vmul.f32 %v1411, 2.0
          %v1472 = vmul.f32 %v1413, 2.0
          %v1473 = vmul.f32 %v1415, 2.0
          %v1474 = vmul.f32 %v1417, 2.0
          %v1475 = vmul.f32 %v1421, 2.0
          %v1476 = vmul.f32 %v1423, 2.0
          %v1477 = vmul.f32 %v1425, 2.0
          %v1478 = vmul.f32 %v1427, 2.0
          %v1479 = vmul.f32 %v1431, 2.0
          %v1480 = vmul.f32 %v1433, 2.0
          %v1481 = vmul.f32 %v1435, 2.0
          %v1482 = vmul.f32 %v1437, 2.0
          %v1483 = vmul.f32 %v1441, 2.0
          %v1484 = vmul.f32 %v1443, 2.0
          %v1485 = vmul.f32 %v1445, 2.0
          %v1486 = vmul.f32 %v1447, 2.0
          %v1487 = vmul.f32 %v1451, 2.0
          %v1488 = vmul.f32 %v1453, 2.0
          %v1489 = vmul.f32 %v1455, 2.0
          %v1490 = vmul.f32 %v1457, 2.0
          %v1491 = vld [vmem:[#allocation2] sm:$0xff]
          %v1492 = vld [vmem:[#allocation2 + $0x8] sm:$0xff]
          %v1493 = vld [vmem:[#allocation2 + $0x10] sm:$0xff]
          %v1494 = vld [vmem:[#allocation2 + $0x18] sm:$0xff]
          %v1495 = vld [vmem:[#allocation2 + $0x20] sm:$0xff]
          %v1496 = vld [vmem:[#allocation2 + $0x28] sm:$0xff]
          %v1497 = vld [vmem:[#allocation2 + $0x30] sm:$0xff]
          %v1498 = vld [vmem:[#allocation2 + $0x38] sm:$0xff]
          %v1499 = vld [vmem:[#allocation2 + $0x40] sm:$0xff]
          %v1500 = vld [vmem:[#allocation2 + $0x48] sm:$0xff]
          %v1501 = vld [vmem:[#allocation2 + $0x50] sm:$0xff]
          %v1502 = vld [vmem:[#allocation2 + $0x58] sm:$0xff]
          %v1503 = vld [vmem:[#allocation2 + $0x60] sm:$0xff]
          %v1504 = vld [vmem:[#allocation2 + $0x68] sm:$0xff]
          %v1505 = vld [vmem:[#allocation2 + $0x70] sm:$0xff]
          %v1506 = vld [vmem:[#allocation2 + $0x78] sm:$0xff]
          %v1507 = vld [vmem:[#allocation2 + $0x80] sm:$0xff]
          %v1508 = vld [vmem:[#allocation2 + $0x88] sm:$0xff]
          %v1509 = vld [vmem:[#allocation2 + $0x90] sm:$0xff]
          %v1510 = vld [vmem:[#allocation2 + $0x98] sm:$0xff]
          %v1511 = vld [vmem:[#allocation2 + $0xa0] sm:$0xff]
          %v1512 = vld [vmem:[#allocation2 + $0xa8] sm:$0xff]
          %v1513 = vld [vmem:[#allocation2 + $0xb0] sm:$0xff]
          %v1514 = vld [vmem:[#allocation2 + $0xb8] sm:$0xff]
          %v1515 = vld [vmem:[#allocation2 + $0xc0] sm:$0xff]
          %v1516 = vld [vmem:[#allocation2 + $0xc8] sm:$0xff]
          %v1517 = vld [vmem:[#allocation2 + $0xd0] sm:$0xff]
          %v1518 = vld [vmem:[#allocation2 + $0xd8] sm:$0xff]
          %v1519 = vld [vmem:[#allocation2 + $0xe0] sm:$0xff]
          %v1520 = vld [vmem:[#allocation2 + $0xe8] sm:$0xff]
          %v1521 = vld [vmem:[#allocation2 + $0xf0] sm:$0xff]
          %v1522 = vld [vmem:[#allocation2 + $0xf8] sm:$0xff]
          %v1523 = vld [vmem:[%s436] sm:$0x3]
          %v1525 = vlaneseq
          %v1526 = vshrl.u32 %v1525, 7
          %v1527 = vsub.s32 0, %v1526
          %v1528 = vrot.slane %v1523, %v1527
          %v1529 = vlaneseq
          %v1530 = vshrl.u32 %v1529, 7
          %v1531 = vsub.s32 1, %v1530
          %v1532 = vrot.slane %v1523, %v1531
          %v1535 = vadd.f32 %v1491, %v1528
          %v1536 = vadd.f32 %v1492, %v1532
          %v1537 = vadd.f32 %v1493, %v1528
          %v1538 = vadd.f32 %v1494, %v1532
          %v1539 = vadd.f32 %v1495, %v1528
          %v1540 = vadd.f32 %v1496, %v1532
          %v1541 = vadd.f32 %v1497, %v1528
          %v1542 = vadd.f32 %v1498, %v1532
          %v1543 = vadd.f32 %v1499, %v1528
          %v1544 = vadd.f32 %v1500, %v1532
          %v1545 = vadd.f32 %v1501, %v1528
          %v1546 = vadd.f32 %v1502, %v1532
          %v1547 = vadd.f32 %v1503, %v1528
          %v1548 = vadd.f32 %v1504, %v1532
          %v1549 = vadd.f32 %v1505, %v1528
          %v1550 = vadd.f32 %v1506, %v1532
          %v1551 = vadd.f32 %v1507, %v1528
          %v1552 = vadd.f32 %v1508, %v1532
          %v1553 = vadd.f32 %v1509, %v1528
          %v1554 = vadd.f32 %v1510, %v1532
          %v1555 = vadd.f32 %v1511, %v1528
          %v1556 = vadd.f32 %v1512, %v1532
          %v1557 = vadd.f32 %v1513, %v1528
          %v1558 = vadd.f32 %v1514, %v1532
          %v1559 = vadd.f32 %v1515, %v1528
          %v1560 = vadd.f32 %v1516, %v1532
          %v1561 = vadd.f32 %v1517, %v1528
          %v1562 = vadd.f32 %v1518, %v1532
          %v1563 = vadd.f32 %v1519, %v1528
          %v1564 = vadd.f32 %v1520, %v1532
          %v1565 = vadd.f32 %v1521, %v1528
          %v1566 = vadd.f32 %v1522, %v1532
          %v1567 = vadd.f32 %v1535, %v1459
          %v1568 = vadd.f32 %v1536, %v1460
          %v1569 = vadd.f32 %v1537, %v1461
          %v1570 = vadd.f32 %v1538, %v1462
          %v1571 = vadd.f32 %v1539, %v1463
          %v1572 = vadd.f32 %v1540, %v1464
          %v1573 = vadd.f32 %v1541, %v1465
          %v1574 = vadd.f32 %v1542, %v1466
          %v1575 = vadd.f32 %v1543, %v1467
          %v1576 = vadd.f32 %v1544, %v1468
          %v1577 = vadd.f32 %v1545, %v1469
          %v1578 = vadd.f32 %v1546, %v1470
          %v1579 = vadd.f32 %v1547, %v1471
          %v1580 = vadd.f32 %v1548, %v1472
          %v1581 = vadd.f32 %v1549, %v1473
          %v1582 = vadd.f32 %v1550, %v1474
          %v1583 = vadd.f32 %v1551, %v1475
          %v1584 = vadd.f32 %v1552, %v1476
          %v1585 = vadd.f32 %v1553, %v1477
          %v1586 = vadd.f32 %v1554, %v1478
          %v1587 = vadd.f32 %v1555, %v1479
          %v1588 = vadd.f32 %v1556, %v1480
          %v1589 = vadd.f32 %v1557, %v1481
          %v1590 = vadd.f32 %v1558, %v1482
          %v1591 = vadd.f32 %v1559, %v1483
          %v1592 = vadd.f32 %v1560, %v1484
          %v1593 = vadd.f32 %v1561, %v1485
          %v1594 = vadd.f32 %v1562, %v1486
          %v1595 = vadd.f32 %v1563, %v1487
          %v1596 = vadd.f32 %v1564, %v1488
          %v1597 = vadd.f32 %v1565, %v1489
          %v1598 = vadd.f32 %v1566, %v1490
          %1599 = vst [vmem:[#allocation8] sm:$0xff] %v1567
          %1600 = vst [vmem:[#allocation8 + $0x8] sm:$0xff] %v1568
          %1601 = vst [vmem:[#allocation8 + $0x10] sm:$0xff] %v1569
          %1602 = vst [vmem:[#allocation8 + $0x18] sm:$0xff] %v1570
          %1603 = vst [vmem:[#allocation8 + $0x20] sm:$0xff] %v1571
          %1604 = vst [vmem:[#allocation8 + $0x28] sm:$0xff] %v1572
          %1605 = vst [vmem:[#allocation8 + $0x30] sm:$0xff] %v1573
          %1606 = vst [vmem:[#allocation8 + $0x38] sm:$0xff] %v1574
          %1607 = vst [vmem:[#allocation8 + $0x40] sm:$0xff] %v1575
          %1608 = vst [vmem:[#allocation8 + $0x48] sm:$0xff] %v1576
          %1609 = vst [vmem:[#allocation8 + $0x50] sm:$0xff] %v1577
          %1610 = vst [vmem:[#allocation8 + $0x58] sm:$0xff] %v1578
          %1611 = vst [vmem:[#allocation8 + $0x60] sm:$0xff] %v1579
          %1612 = vst [vmem:[#allocation8 + $0x68] sm:$0xff] %v1580
          %1613 = vst [vmem:[#allocation8 + $0x70] sm:$0xff] %v1581
          %1614 = vst [vmem:[#allocation8 + $0x78] sm:$0xff] %v1582
          %1615 = vst [vmem:[#allocation8 + $0x80] sm:$0xff] %v1583
          %1616 = vst [vmem:[#allocation8 + $0x88] sm:$0xff] %v1584
          %1617 = vst [vmem:[#allocation8 + $0x90] sm:$0xff] %v1585
          %1618 = vst [vmem:[#allocation8 + $0x98] sm:$0xff] %v1586
          %1619 = vst [vmem:[#allocation8 + $0xa0] sm:$0xff] %v1587
          %1620 = vst [vmem:[#allocation8 + $0xa8] sm:$0xff] %v1588
          %1621 = vst [vmem:[#allocation8 + $0xb0] sm:$0xff] %v1589
          %1622 = vst [vmem:[#allocation8 + $0xb8] sm:$0xff] %v1590
          %1623 = vst [vmem:[#allocation8 + $0xc0] sm:$0xff] %v1591
          %1624 = vst [vmem:[#allocation8 + $0xc8] sm:$0xff] %v1592
          %1625 = vst [vmem:[#allocation8 + $0xd0] sm:$0xff] %v1593
          %1626 = vst [vmem:[#allocation8 + $0xd8] sm:$0xff] %v1594
          %1627 = vst [vmem:[#allocation8 + $0xe0] sm:$0xff] %v1595
          %1628 = vst [vmem:[#allocation8 + $0xe8] sm:$0xff] %v1596
          %1629 = vst [vmem:[#allocation8 + $0xf0] sm:$0xff] %v1597
          %1630 = vst [vmem:[#allocation8 + $0xf8] sm:$0xff] %v1598
        $region90: #{tpu_custom_call.1} parent=73 // pred_fallthru
          _
        // Predicated region
        $region91: #{tpu_custom_call.1} parent=73 // pred_check
          %p1631 = pneg %p193
        $region92: #{tpu_custom_call.1} parent=73 // pred_check_branch
          %1633 = sbr.rel (%p1631) target = $region94
        $region93: #{tpu_custom_call.1} parent=73 // pred_region
          %s1634 = smul.u32 16, %s25
          %s1635 = smul.u32 2, %s26
          %s1637 = ssub.s32 4096, 4096
          %1638 = vsyncadd [#allocation7], %s1637
          %s1639 = smul.addr %s1634, 2
          %s1640 = sadd.s32 %s1635, %s1639
          %s1641 = smul.addr %s1640, 128
          %s1642 = scalar_lea.hbm %s5, %s1641
          %s1643 = sshll.u32 [#allocation8], 4
          %s1644 = int_to_ptr.vmem [resolvable:$true] %s1643
          %1649 = dma.vmem_to_hbm [thread:$0]  %s1644, 4096, %s1642, [#allocation7], 256, 256, 16
        $region94: #{tpu_custom_call.1} parent=73 // pred_fallthru
          _
        // Predicated region
        $region95: #{tpu_custom_call.1} parent=73 // pred_check
          %p1650 = pneg %p193
        $region96: #{tpu_custom_call.1} parent=73 // pred_check_branch
          %1652 = sbr.rel (%p1650) target = $region98
        $region97: #{tpu_custom_call.1} parent=73 // pred_region
          %1653 = dma.done [#allocation7], 4096
        $region98: #{tpu_custom_call.1} parent=73 // pred_fallthru
          _
      $region74: #{tpu_custom_call.1} parent=5 // pred_fallthru
        _
      %p1654 = scmp.le.s32.totalorder 2, %s15
      // Predicated region
      $region99: #{tpu_custom_call.1} parent=5 // pred_check
        %p1655 = pneg %p1654
      $region100: #{tpu_custom_call.1} parent=5 // pred_check_branch
        %1657 = sbr.rel (%p1655) target = $region102
      $region101: #{tpu_custom_call.1} parent=5 // pred_region
        %s1658 = ssub.s32 %s15, 2
      $region102: #{tpu_custom_call.1} parent=5 // pred_fallthru
        _
    $region6: #{tpu_custom_call.1} parent=1 // loop_footer
      %s19 = sadd.s32 1, %s15
    $region7: #{tpu_custom_call.1} parent=1 // loop_footer_branch
      %14 = sbr.rel target = $region3
    $region8: #{tpu_custom_call.1} parent=1 // loop_exit
      _
    %1659 = vsyncpa [#allocation6], 1
    %s1660 = scalar_lea.sflag [#allocation6], 1
    %1661 = vsyncpa %s1660, 1
    %1662 = vsyncpa [#allocation7], 1
    %s1663 = scalar_lea.sflag [#allocation7], 1
    %1664 = vsyncpa %s1663, 1

</llo_original>
